<compile_context>
chip_gen: v7x
topology: tpu7x:2x2x1
jax: 0.10.0
libtpu: 0.0.40
codegen_flags: <defaults>
</compile_context>

<pallas_src>
import jax
import jax.numpy as jnp
from jax.experimental import pallas as pl
from jax.experimental.pallas import tpu as pltpu

ATOM_FEATURE_DIMS = [119, 5, 12, 12, 10, 6, 6, 2, 2]   # OGB AtomEncoder vocab sizes
BOND_FEATURE_DIMS = [5, 6, 2]                           # OGB BondEncoder vocab sizes


def _round_up(x, m):
    return ((x + m - 1) // m) * m


# --------------------------- Pallas kernel ---------------------------------
def gin_stack_kernel(eps_ref, h0_ref, src_ref, dstT_ref, ee_ref,
                     W1_ref, b1_ref, W2_ref, b2_ref, o_ref, agg_ref):
    l = pl.program_id(0)                 # layer axis (sequential carry)
    e = pl.program_id(1)                 # edge-tile axis (reduction, innermost)
    last_l = pl.num_programs(0) - 1
    last_e = pl.num_programs(1) - 1

    # Output block index is constant over the whole grid, so o_ref stays resident in VMEM and
    # doubles as the layer carry (single HBM writeback at the very end).
    @pl.when(jnp.logical_and(l == 0, e == 0))
    def _():
        o_ref[...] = h0_ref[...]

    # Zero the scatter-add accumulator at the start of each layer's edge reduction.
    @pl.when(e == 0)
    def _():
        agg_ref[...] = jnp.zeros_like(agg_ref)

    h = o_ref[...]                                   # [Np, Dp] f32 layer carry
    h_bf = h.astype(jnp.bfloat16)                    # bf16 MXU inputs, f32 accumulation

    # ---- GIN message passing on this edge tile (bf16 MXU, exact 0/1 one-hots) ----
    xj = jnp.dot(src_ref[...], h_bf,
                 preferred_element_type=jnp.float32)                     # [TE, Dp] gather x_j
    msg = jnp.maximum(xj + ee_ref[...].astype(jnp.float32), 0.0)         # relu(x_j + edge_emb)
    agg_ref[...] += jnp.dot(dstT_ref[...], msg.astype(jnp.bfloat16),
                            preferred_element_type=jnp.float32)          # [Np, Dp] scatter-add

    # ---- finalize the layer on the last edge tile ----
    @pl.when(e == last_e)
    def _():
        pre = (1.0 + eps_ref[l]) * h + agg_ref[...]
        # GIN MLP: Linear(D->2D) -> [folded BN] -> ReLU -> Linear(2D->D) -> [folded outer BN]
        # (kept f32 on the MXU so the bf16 rounding is confined to the exact-operand edge matmuls)
        hid = jnp.maximum(
            jnp.dot(pre, W1_ref[...], preferred_element_type=jnp.float32) + b1_ref[...], 0.0)
        out = jnp.dot(hid, W2_ref[...], preferred_element_type=jnp.float32) + b2_ref[...]

        # ReLU on all but the last layer; dropout is identity in eval mode.
        # TODO(synk): training-mode dropout (pltpu.prng_random_bits mask) and batch-stat BN not implemented.
        @pl.when(l != last_l)
        def _():
            o_ref[...] = jnp.maximum(out, 0.0)

        @pl.when(l == last_l)
        def _():
            o_ref[...] = out


# --------------------------- JAX glue ---------------------------------------
def embed_sum(tables, feats):
    """Sum of per-column embedding lookups (OGB Atom/Bond encoder)."""
    out = jnp.zeros((feats.shape[0], tables[0].shape[1]), jnp.float32)
    for f, tbl in enumerate(tables):
        out = out + tbl[feats[:, f]]
    return out


def init_params(key, num_layers, emb_dim):
    D, H = emb_dim, 2 * emb_dim
    ks = iter(jax.random.split(key, 64))
    p = {}
    p["atom_tables"] = [0.1 * jax.random.normal(next(ks), (v, D), jnp.float32)
                        for v in ATOM_FEATURE_DIMS]
    p["bond_tables"] = [[0.1 * jax.random.normal(next(ks), (v, D), jnp.float32)
                         for v in BOND_FEATURE_DIMS] for _ in range(num_layers)]
    p["eps"] = jnp.zeros((num_layers,), jnp.float32)                      # GIN eps init = 0
    p["W1"] = 0.1 * jax.random.normal(next(ks), (num_layers, D, H), jnp.float32)
    p["b1"] = 0.1 * jax.random.normal(next(ks), (num_layers, 1, H), jnp.float32)
    p["W2"] = 0.1 * jax.random.normal(next(ks), (num_layers, H, D), jnp.float32)
    p["b2"] = 0.1 * jax.random.normal(next(ks), (num_layers, 1, D), jnp.float32)
    # BatchNorm (PyTorch defaults: gamma=1, beta=0, running_mean=0, running_var=1, eps=1e-5)
    bn_eps = 1e-5
    scale = jnp.float32(1.0 / jnp.sqrt(1.0 + bn_eps))
    p["s1"] = jnp.full((num_layers, 1, H), scale, jnp.float32)            # inner-MLP BN scale
    p["t1"] = jnp.zeros((num_layers, 1, H), jnp.float32)                  # inner-MLP BN shift
    p["s2"] = jnp.full((num_layers, 1, D), scale, jnp.float32)            # outer BN scale
    p["t2"] = jnp.zeros((num_layers, 1, D), jnp.float32)                  # outer BN shift
    return p


def gnn_2d_enc_forward(x, edge_index, edge_attr, params, num_layers, emb_dim, edge_tile=512):
    N = x.shape[0]
    E = edge_index.shape[1]
    D, H = emb_dim, 2 * emb_dim
    # Lane-dense / sublane-aligned padded sizes.
    Np, Dp, Hp = _round_up(N, 8), _round_up(D, 128), _round_up(H, 128)
    # TODO(synk): at real OGB batch sizes, batch graphs upstream so Np is a multiple of 256
    # (v6e/v7x MXU rows) instead of 8; at tiny Np every matmul is MXU-latency-bound regardless.

    # Edge-tile axis: keeps resident VMEM bounded at realistic edge counts (reduction axis last).
    if E <= edge_tile:
        Ep = _round_up(E, 8)
        TE = Ep                      # single tile: block == full array dim, no 128-divisibility needed
    else:
        assert edge_tile % 128 == 0, "edge tile must be lane-aligned when tiling the edge axis"
        TE = edge_tile
        Ep = _round_up(E, TE)
    n_etiles = Ep // TE

    # ---- plain-JAX glue: embedding lookups, zero-padded to padded shapes ----
    h0 = jnp.pad(embed_sum(params["atom_tables"], x),
                 ((0, Np - N), (0, Dp - D)))                                         # [Np, Dp] f32
    ee = jnp.stack([embed_sum(params["bond_tables"][l], edge_attr)
                    for l in range(num_layers)])                                     # [L, E, D]
    ee = jnp.pad(ee, ((0, 0), (0, Ep - E), (0, Dp - D))).astype(jnp.bfloat16)        # [L, Ep, Dp] bf16

    # One-hot gather/scatter operators (bf16, 0/1 exact). src in [Ep, Np]; dst shipped PRE-TRANSPOSED
    # as [Np, Ep] so the in-kernel scatter is a plain jnp.dot (no XLU transpose of an edge tile).
    # Padded edge rows/cols are all-zero, so they contribute nothing.
    src_oh = jnp.pad(jax.nn.one_hot(edge_index[0], Np, dtype=jnp.float32),
                     ((0, Ep - E), (0, 0))).astype(jnp.bfloat16)                     # [Ep, Np]
    dstT_oh = jnp.pad(jax.nn.one_hot(edge_index[1], Np, dtype=jnp.float32),
                      ((0, Ep - E), (0, 0))).T.astype(jnp.bfloat16)                  # [Np, Ep]
    # TODO(synk): for very large sparse graphs replace the dense one-hot gather with a
    # scalar-prefetched (PrefetchScalarGridSpec) indexed gather to kill the O(E*N*D) FLOP blowup.

    # ---- eval-mode BN fold: (x@W + b)*s + t == x@(W*s) + (b*s + t); zero-pad to lane-dense ----
    W1f = jnp.pad(params["W1"] * params["s1"], ((0, 0), (0, Dp - D), (0, Hp - H)))
    b1f = jnp.pad(params["b1"] * params["s1"] + params["t1"], ((0, 0), (0, 0), (0, Hp - H)))
    W2f = jnp.pad(params["W2"] * params["s2"], ((0, 0), (0, Hp - H), (0, Dp - D)))
    b2f = jnp.pad(params["b2"] * params["s2"] + params["t2"], ((0, 0), (0, 0), (0, Dp - D)))

    perL = lambda a, b: pl.BlockSpec((None, a, b), lambda l, e: (l, 0, 0))

    grid_spec = pltpu.PrefetchScalarGridSpec(
        num_scalar_prefetch=0,
        grid=(num_layers, n_etiles),
        in_specs=[
            pl.BlockSpec(memory_space=pltpu.MemorySpace.SMEM),              # eps [L] scalars
            pl.BlockSpec((Np, Dp), lambda l, e: (0, 0)),                    # h0 (fetched once)
            pl.BlockSpec((TE, Np), lambda l, e: (e, 0)),                    # src one-hot tile (bf16)
            pl.BlockSpec((Np, TE), lambda l, e: (0, e)),                    # dst^T one-hot tile (bf16)
            pl.BlockSpec((None, TE, Dp), lambda l, e: (l, e, 0)),           # per-layer edge-emb tile (bf16)
            perL(Dp, Hp),                                                   # W1 (BN folded)
            perL(1, Hp),                                                    # b1 (BN folded)
            perL(Hp, Dp),                                                   # W2 (BN folded)
            perL(1, Dp),                                                    # b2 (BN folded)
            # TODO(synk): if a v5e profile shows exposed weight DMA at layer boundaries, add
            # pipeline_mode=pl.Buffered(3) on the W/b specs (re-check the 64 MiB budget on v7x first).
        ],
        out_specs=pl.BlockSpec((Np, Dp), lambda l, e: (0, 0)),
        scratch_shapes=[pltpu.VMEM((Np, Dp), jnp.float32)],                 # scatter-add accumulator
    )

    # VMEM budget derived from the actual padded shapes (valid for v7x's 64 MiB physical VMEM):
    # resident carry/out/h0/acc + 2x-buffered streamed tiles + headroom.
    bytes_resident = 4 * Np * Dp * 4
    bytes_stream = (TE * Np * 2 + Np * TE * 2 + TE * Dp * 2        # bf16 src/dst^T/ee tiles
                    + Dp * Hp * 4 + Hp * 4 + Hp * Dp * 4 + Dp * 4)  # f32 folded weights/biases
    vmem_limit = int(min(max(bytes_resident + 2 * bytes_stream + (4 << 20), 8 << 20), 48 << 20))

    out = pl.pallas_call(
        gin_stack_kernel,
        grid_spec=grid_spec,
        out_shape=jax.ShapeDtypeStruct((Np, Dp), jnp.float32),
        compiler_params=pltpu.CompilerParams(
            dimension_semantics=("arbitrary", "arbitrary"),   # layer carry + edge reduction: both sequential
            vmem_limit_bytes=vmem_limit),
        # TODO(synk): add a leading "parallel" per-graph (or partitioned node-tile) axis to occupy
        # v7x's second TensorCore; the layer axis itself is inherently sequential.
    )(params["eps"], h0, src_oh, dstT_oh, ee, W1f, b1f, W2f, b2f)

    # Padded node rows (N..Np) pick up bias-driven values but have no edges and are sliced off here.
    return out[:N, :D]


# --------------------------- pure-JAX reference ------------------------------
def reference_forward(x, edge_index, edge_attr, params, num_layers, emb_dim):
    h = embed_sum(params["atom_tables"], x)
    for l in range(num_layers):
        ee = embed_sum(params["bond_tables"][l], edge_attr)
        msg = jnp.maximum(h[edge_index[0]] + ee, 0.0)
        agg = jnp.zeros_like(h).at[edge_index[1]].add(msg)
        pre = (1.0 + params["eps"][l]) * h + agg
        hid = pre @ params["W1"][l] + params["b1"][l, 0]
        hid = jnp.maximum(hid * params["s1"][l, 0] + params["t1"][l, 0], 0.0)
        out = hid @ params["W2"][l] + params["b2"][l, 0]
        out = out * params["s2"][l, 0] + params["t2"][l, 0]
        if l != num_layers - 1:
            out = jnp.maximum(out, 0.0)
        h = out
    return h


# --------------------------- main --------------------------------------------
if __name__ == "__main__":
    num_layers, emb_dim = 3, 32
    N, E = 16, 300            # E > edge_tile below -> exercises the multi-edge-tile reduction path

    key = jax.random.PRNGKey(0)
    k_par, k_x, k_ei, k_ea = jax.random.split(key, 4)
    params = init_params(k_par, num_layers, emb_dim)

    xk = jax.random.split(k_x, len(ATOM_FEATURE_DIMS))
    x = jnp.stack([jax.random.randint(xk[i], (N,), 0, v)
                   for i, v in enumerate(ATOM_FEATURE_DIMS)], axis=1).astype(jnp.int32)
    edge_index = jax.random.randint(k_ei, (2, E), 0, N).astype(jnp.int32)
    ek = jax.random.split(k_ea, len(BOND_FEATURE_DIMS))
    edge_attr = jnp.stack([jax.random.randint(ek[i], (E,), 0, v)
                           for i, v in enumerate(BOND_FEATURE_DIMS)], axis=1).astype(jnp.int32)

    out = gnn_2d_enc_forward(x, edge_index, edge_attr, params, num_layers, emb_dim,
                             edge_tile=128)
    out = jax.block_until_ready(out)

    ref = reference_forward(x, edge_index, edge_attr, params, num_layers, emb_dim)
    assert out.shape == (N, emb_dim)
    # Tolerance loosened vs the pure-f32 reference: the edge gather/scatter matmuls and edge
    # embeddings now run on the native bf16 MXU path (f32 accumulation), per the perf review.
    assert jnp.allclose(out, ref, rtol=2e-2, atol=2e-2), "mismatch vs pure-JAX reference"

    print("KERNEL_OK")
</pallas_src>

<mosaic_0001>
module attributes {stable_mosaic.version = 11 : i64} {
  func.func @gin_stack_kernel(%arg0: i32, %arg1: i32, %arg2: memref<3xf32, #tpu.memory_space<smem>>, %arg3: memref<16x128xf32, #tpu.memory_space<vmem>>, %arg4: memref<128x16xbf16, #tpu.memory_space<vmem>>, %arg5: memref<16x128xbf16, #tpu.memory_space<vmem>>, %arg6: memref<1x128x128xbf16, #tpu.memory_space<vmem>>, %arg7: memref<1x128x128xf32, #tpu.memory_space<vmem>>, %arg8: memref<1x1x128xf32, #tpu.memory_space<vmem>>, %arg9: memref<1x128x128xf32, #tpu.memory_space<vmem>>, %arg10: memref<1x1x128xf32, #tpu.memory_space<vmem>>, %arg11: memref<16x128xf32, #tpu.memory_space<vmem>>, %arg12: memref<16x128xf32, #tpu.memory_space<vmem>>) attributes {dimension_semantics = [#tpu.dimension_semantics<arbitrary>, #tpu.dimension_semantics<arbitrary>], iteration_bounds = array<i64: 3, 3>, scalar_prefetch = 0 : i64, scratch_operands = 1 : i64, tpu.core_type = #tpu.core_type<tc>, window_params = [{transform_indices = @transform_0, window_bounds = array<i64: 3>}, {pipeline_mode = #tpu.pipeline_mode<synchronous>, transform_indices = @transform_1, window_bounds = array<i64: 16, 128>}, {transform_indices = @transform_2, window_bounds = array<i64: 128, 16>}, {transform_indices = @transform_3, window_bounds = array<i64: 16, 128>}, {transform_indices = @transform_4, window_bounds = array<i64: 1, 128, 128>}, {transform_indices = @transform_5, window_bounds = array<i64: 1, 128, 128>}, {transform_indices = @transform_6, window_bounds = array<i64: 1, 1, 128>}, {transform_indices = @transform_7, window_bounds = array<i64: 1, 128, 128>}, {transform_indices = @transform_8, window_bounds = array<i64: 1, 1, 128>}, {pipeline_mode = #tpu.pipeline_mode<synchronous>, transform_indices = @transform_9, window_bounds = array<i64: 16, 128>}]} {
    %c0_i32 = arith.constant 0 : i32
    %0 = arith.cmpi eq, %arg0, %c0_i32 : i32
    %c0_i32_0 = arith.constant 0 : i32
    %1 = arith.cmpi eq, %arg1, %c0_i32_0 : i32
    %2 = arith.andi %0, %1 : i1
    %3 = arith.extui %2 : i1 to i32
    %c0_i32_1 = arith.constant 0 : i32
    %4 = arith.cmpi ne, %3, %c0_i32_1 : i32
    scf.if %4 {
      %c0_19 = arith.constant 0 : index
      %c0_20 = arith.constant 0 : index
      %27 = vector.load %arg3[%c0_19, %c0_20] : memref<16x128xf32, #tpu.memory_space<vmem>>, vector<16x128xf32>
      %c0_21 = arith.constant 0 : index
      %c0_22 = arith.constant 0 : index
      %28 = vector.load %arg11[%c0_21, %c0_22] : memref<16x128xf32, #tpu.memory_space<vmem>>, vector<16x128xf32>
      tpu.vector_store %arg11[%c0_21, %c0_22], %27 {strides = array<i32>} : memref<16x128xf32, #tpu.memory_space<vmem>>, vector<16x128xf32>,
    } else {
    }
    %c0_i32_2 = arith.constant 0 : i32
    %5 = arith.cmpi eq, %arg1, %c0_i32_2 : i32
    %6 = arith.extui %5 : i1 to i32
    %c0_i32_3 = arith.constant 0 : i32
    %7 = arith.cmpi ne, %6, %c0_i32_3 : i32
    scf.if %7 {
      %cst_19 = arith.constant 0.000000e+00 : f32
      %27 = vector.broadcast %cst_19 : f32 to vector<16x128xf32>
      %c0_20 = arith.constant 0 : index
      %c0_21 = arith.constant 0 : index
      %28 = vector.load %arg12[%c0_20, %c0_21] : memref<16x128xf32, #tpu.memory_space<vmem>>, vector<16x128xf32>
      tpu.vector_store %arg12[%c0_20, %c0_21], %27 {strides = array<i32>} : memref<16x128xf32, #tpu.memory_space<vmem>>, vector<16x128xf32>,
    } else {
    }
    %c0 = arith.constant 0 : index
    %c0_4 = arith.constant 0 : index
    %8 = vector.load %arg11[%c0, %c0_4] : memref<16x128xf32, #tpu.memory_space<vmem>>, vector<16x128xf32>
    %9 = arith.truncf %8 : vector<16x128xf32> to vector<16x128xbf16>
    %c0_5 = arith.constant 0 : index
    %c0_6 = arith.constant 0 : index
    %10 = vector.load %arg4[%c0_5, %c0_6] : memref<128x16xbf16, #tpu.memory_space<vmem>>, vector<128x16xbf16>
    %cst = arith.constant dense<0.000000e+00> : vector<128x128xf32>
    %11 = tpu.matmul %10, %9, %cst {dimension_numbers = #tpu.dot_dimension_numbers<[1], [0], [0], [1], [0, 0, 1, 1], [], []>} : vector<128x16xbf16>, vector<16x128xbf16>, vector<128x128xf32> -> vector<128x128xf32>
    %c0_7 = arith.constant 0 : index
    %c0_8 = arith.constant 0 : index
    %c0_9 = arith.constant 0 : index
    %12 = vector.load %arg6[%c0_7, %c0_8, %c0_9] : memref<1x128x128xbf16, #tpu.memory_space<vmem>>, vector<1x128x128xbf16>
    %13 = vector.shape_cast %12 : vector<1x128x128xbf16> to vector<128x128xbf16>
    %14 = arith.extf %13 : vector<128x128xbf16> to vector<128x128xf32>
    %15 = arith.addf %11, %14 : vector<128x128xf32>
    %cst_10 = arith.constant 0.000000e+00 : f32
    %16 = vector.broadcast %cst_10 : f32 to vector<128x128xf32>
    %17 = arith.maximumf %15, %16 : vector<128x128xf32>
    %c0_11 = arith.constant 0 : index
    %c0_12 = arith.constant 0 : index
    %18 = vector.load %arg12[%c0_11, %c0_12] : memref<16x128xf32, #tpu.memory_space<vmem>>, vector<16x128xf32>
    %c0_13 = arith.constant 0 : index
    %c0_14 = arith.constant 0 : index
    %19 = vector.load %arg5[%c0_13, %c0_14] : memref<16x128xbf16, #tpu.memory_space<vmem>>, vector<16x128xbf16>
    %20 = arith.truncf %17 : vector<128x128xf32> to vector<128x128xbf16>
    %cst_15 = arith.constant dense<0.000000e+00> : vector<16x128xf32>
    %21 = tpu.matmul %19, %20, %cst_15 {dimension_numbers = #tpu.dot_dimension_numbers<[1], [0], [0], [1], [0, 0, 1, 1], [], []>} : vector<16x128xbf16>, vector<128x128xbf16>, vector<16x128xf32> -> vector<16x128xf32>
    %22 = arith.addf %18, %21 : vector<16x128xf32>
    %c0_16 = arith.constant 0 : index
    %c0_17 = arith.constant 0 : index
    %23 = vector.load %arg12[%c0_16, %c0_17] : memref<16x128xf32, #tpu.memory_space<vmem>>, vector<16x128xf32>
    tpu.vector_store %arg12[%c0_16, %c0_17], %22 {strides = array<i32>} : memref<16x128xf32, #tpu.memory_space<vmem>>, vector<16x128xf32>,
    %c2_i32 = arith.constant 2 : i32
    %24 = arith.cmpi eq, %arg1, %c2_i32 : i32
    %25 = arith.extui %24 : i1 to i32
    %c0_i32_18 = arith.constant 0 : i32
    %26 = arith.cmpi ne, %25, %c0_i32_18 : i32
    scf.if %26 {
      %27 = arith.index_cast %arg0 : i32 to index
      %28 = memref.load %arg2[%27] : memref<3xf32, #tpu.memory_space<smem>>
      %cst_19 = arith.constant 1.000000e+00 : f32
      %29 = arith.addf %cst_19, %28 : f32
      %30 = vector.broadcast %29 : f32 to vector<16x128xf32>
      %31 = arith.mulf %30, %8 : vector<16x128xf32>
      %c0_20 = arith.constant 0 : index
      %c0_21 = arith.constant 0 : index
      %32 = vector.load %arg12[%c0_20, %c0_21] : memref<16x128xf32, #tpu.memory_space<vmem>>, vector<16x128xf32>
      %33 = arith.addf %31, %32 : vector<16x128xf32>
      %c0_22 = arith.constant 0 : index
      %c0_23 = arith.constant 0 : index
      %c0_24 = arith.constant 0 : index
      %34 = vector.load %arg7[%c0_22, %c0_23, %c0_24] : memref<1x128x128xf32, #tpu.memory_space<vmem>>, vector<1x128x128xf32>
      %35 = vector.shape_cast %34 : vector<1x128x128xf32> to vector<128x128xf32>
      %cst_25 = arith.constant dense<0.000000e+00> : vector<16x128xf32>
      %36 = tpu.matmul %33, %35, %cst_25 {dimension_numbers = #tpu.dot_dimension_numbers<[1], [0], [0], [1], [0, 0, 1, 1], [], []>} : vector<16x128xf32>, vector<128x128xf32>, vector<16x128xf32> -> vector<16x128xf32>
      %c0_26 = arith.constant 0 : index
      %c0_27 = arith.constant 0 : index
      %c0_28 = arith.constant 0 : index
      %37 = vector.load %arg8[%c0_26, %c0_27, %c0_28] : memref<1x1x128xf32, #tpu.memory_space<vmem>>, vector<1x1x128xf32>
      %38 = vector.shape_cast %37 : vector<1x1x128xf32> to vector<1x128xf32>
      %39 = vector.broadcast %38 : vector<1x128xf32> to vector<16x128xf32>
      %40 = arith.addf %36, %39 : vector<16x128xf32>
      %cst_29 = arith.constant 0.000000e+00 : f32
      %41 = vector.broadcast %cst_29 : f32 to vector<16x128xf32>
      %42 = arith.maximumf %40, %41 : vector<16x128xf32>
      %c0_30 = arith.constant 0 : index
      %c0_31 = arith.constant 0 : index
      %c0_32 = arith.constant 0 : index
      %43 = vector.load %arg9[%c0_30, %c0_31, %c0_32] : memref<1x128x128xf32, #tpu.memory_space<vmem>>, vector<1x128x128xf32>
      %44 = vector.shape_cast %43 : vector<1x128x128xf32> to vector<128x128xf32>
      %cst_33 = arith.constant dense<0.000000e+00> : vector<16x128xf32>
      %45 = tpu.matmul %42, %44, %cst_33 {dimension_numbers = #tpu.dot_dimension_numbers<[1], [0], [0], [1], [0, 0, 1, 1], [], []>} : vector<16x128xf32>, vector<128x128xf32>, vector<16x128xf32> -> vector<16x128xf32>
      %c0_34 = arith.constant 0 : index
      %c0_35 = arith.constant 0 : index
      %c0_36 = arith.constant 0 : index
      %46 = vector.load %arg10[%c0_34, %c0_35, %c0_36] : memref<1x1x128xf32, #tpu.memory_space<vmem>>, vector<1x1x128xf32>
      %47 = vector.shape_cast %46 : vector<1x1x128xf32> to vector<1x128xf32>
      %48 = vector.broadcast %47 : vector<1x128xf32> to vector<16x128xf32>
      %49 = arith.addf %45, %48 : vector<16x128xf32>
      %c2_i32_37 = arith.constant 2 : i32
      %50 = arith.cmpi ne, %arg0, %c2_i32_37 : i32
      %51 = arith.extui %50 : i1 to i32
      %c0_i32_38 = arith.constant 0 : i32
      %52 = arith.cmpi ne, %51, %c0_i32_38 : i32
      scf.if %52 {
        %cst_41 = arith.constant 0.000000e+00 : f32
        %56 = vector.broadcast %cst_41 : f32 to vector<16x128xf32>
        %57 = arith.maximumf %49, %56 : vector<16x128xf32>
        %c0_42 = arith.constant 0 : index
        %c0_43 = arith.constant 0 : index
        %58 = vector.load %arg11[%c0_42, %c0_43] : memref<16x128xf32, #tpu.memory_space<vmem>>, vector<16x128xf32>
        tpu.vector_store %arg11[%c0_42, %c0_43], %57 {strides = array<i32>} : memref<16x128xf32, #tpu.memory_space<vmem>>, vector<16x128xf32>,
      } else {
      }
      %c2_i32_39 = arith.constant 2 : i32
      %53 = arith.cmpi eq, %arg0, %c2_i32_39 : i32
      %54 = arith.extui %53 : i1 to i32
      %c0_i32_40 = arith.constant 0 : i32
      %55 = arith.cmpi ne, %54, %c0_i32_40 : i32
      scf.if %55 {
        %c0_41 = arith.constant 0 : index
        %c0_42 = arith.constant 0 : index
        %56 = vector.load %arg11[%c0_41, %c0_42] : memref<16x128xf32, #tpu.memory_space<vmem>>, vector<16x128xf32>
        tpu.vector_store %arg11[%c0_41, %c0_42], %49 {strides = array<i32>} : memref<16x128xf32, #tpu.memory_space<vmem>>, vector<16x128xf32>,
      } else {
      }
    } else {
    }
    return
  }
  func.func @transform_0(%arg0: i32, %arg1: i32) -> i32 {
    %c0_i32 = arith.constant 0 : i32
    %c0_i32_0 = arith.constant 0 : i32
    return %c0_i32 : i32
  }
  func.func @transform_1(%arg0: i32, %arg1: i32) -> (i32, i32) {
    %c0_i32 = arith.constant 0 : i32
    %c0_i32_0 = arith.constant 0 : i32
    %c0_i32_1 = arith.constant 0 : i32
    return %c0_i32, %c0_i32_0 : i32, i32
  }
  func.func @transform_2(%arg0: i32, %arg1: i32) -> (i32, i32) {
    %c0_i32 = arith.constant 0 : i32
    %c0_i32_0 = arith.constant 0 : i32
    return %arg1, %c0_i32 : i32, i32
  }
  func.func @transform_3(%arg0: i32, %arg1: i32) -> (i32, i32) {
    %c0_i32 = arith.constant 0 : i32
    %c0_i32_0 = arith.constant 0 : i32
    return %c0_i32, %arg1 : i32, i32
  }
  func.func @transform_4(%arg0: i32, %arg1: i32) -> (i32, i32, i32) {
    %c0_i32 = arith.constant 0 : i32
    %c0_i32_0 = arith.constant 0 : i32
    return %arg0, %arg1, %c0_i32 : i32, i32, i32
  }
  func.func @transform_5(%arg0: i32, %arg1: i32) -> (i32, i32, i32) {
    %c0_i32 = arith.constant 0 : i32
    %c0_i32_0 = arith.constant 0 : i32
    %c0_i32_1 = arith.constant 0 : i32
    return %arg0, %c0_i32, %c0_i32_0 : i32, i32, i32
  }
  func.func @transform_6(%arg0: i32, %arg1: i32) -> (i32, i32, i32) {
    %c0_i32 = arith.constant 0 : i32
    %c0_i32_0 = arith.constant 0 : i32
    %c0_i32_1 = arith.constant 0 : i32
    return %arg0, %c0_i32, %c0_i32_0 : i32, i32, i32
  }
  func.func @transform_7(%arg0: i32, %arg1: i32) -> (i32, i32, i32) {
    %c0_i32 = arith.constant 0 : i32
    %c0_i32_0 = arith.constant 0 : i32
    %c0_i32_1 = arith.constant 0 : i32
    return %arg0, %c0_i32, %c0_i32_0 : i32, i32, i32
  }
  func.func @transform_8(%arg0: i32, %arg1: i32) -> (i32, i32, i32) {
    %c0_i32 = arith.constant 0 : i32
    %c0_i32_0 = arith.constant 0 : i32
    %c0_i32_1 = arith.constant 0 : i32
    return %arg0, %c0_i32, %c0_i32_0 : i32, i32, i32
  }
  func.func @transform_9(%arg0: i32, %arg1: i32) -> (i32, i32) {
    %c0_i32 = arith.constant 0 : i32
    %c0_i32_0 = arith.constant 0 : i32
    %c0_i32_1 = arith.constant 0 : i32
    return %c0_i32, %c0_i32_0 : i32, i32
  }
}

</mosaic_0001>

<llo_original>
// kernel: tpu_custom_call.1
$region0: #{tpu_custom_call.1}
  #allocation0 [shape = 'u32[]', space=smem, size = 0x4, offset = 0x4, fixed_abs, tag = 'smem constant byte address 0x4 - core index']
  #allocation1 [shape = 'u32[144,128]{1,0:T(1,128)}', space=vmem, size = 0x12000, scoped, tag = 'internal scratch']
  #allocation2 [shape = 'f32[16,128]{1,0:T(8,128)}', space=vmem, size = 0x2000, scoped, tag = 'scratch operand']
  %s0 = inlined_call_operand.vmem [shape: f32[3], index: 0, kind: input, shape index: {}]
  %s1 = inlined_call_operand.vmem [shape: f32[16,128], index: 1, kind: input, shape index: {}]
  %s2 = inlined_call_operand.vmem [shape: bf16[384,16], index: 2, kind: input, shape index: {}]
  %s3 = inlined_call_operand.vmem [shape: bf16[16,384], index: 3, kind: input, shape index: {}]
  %s4 = inlined_call_operand.hbm [shape: bf16[3,384,128], index: 4, kind: input, shape index: {}]
  %s5 = inlined_call_operand.hbm [shape: f32[3,128,128], index: 5, kind: input, shape index: {}]
  %s6 = inlined_call_operand.vmem [shape: f32[3,1,128], index: 6, kind: input, shape index: {}]
  %s7 = inlined_call_operand.hbm [shape: f32[3,128,128], index: 7, kind: input, shape index: {}]
  %s8 = inlined_call_operand.vmem [shape: f32[3,1,128], index: 8, kind: input, shape index: {}]
  %s9 = inlined_call_operand.hbm [shape: f32[16,128], index: 9, kind: output, shape index: {}]
  %s10 = sld [smem:[#allocation0]]
  $region146: #{tpu_custom_call.1} parent=0
    _
  %s12 = ssub.s32 1, %s10
  %s13 = scalar_select 0, %s12, %s10
  $region1: #{tpu_custom_call.1} parent=0
    #allocation3 [shape = 'u8[512]{0}', space=smem, size = 0x200, scoped, tag = 'input window, operand 0, single buffered']
    #allocation4 [shape = 's32[2]{0}', space=sflag, size = 0x8, scoped, tag = 'scoped memory for tpu_custom_call.1']
    #allocation5 [shape = 's32[2]{0}', space=sflag, size = 0x8, scoped, tag = 'scoped memory for tpu_custom_call.1']
    #allocation6 [shape = 's32[2]{0}', space=sflag, size = 0x8, scoped, tag = 'scoped memory for tpu_custom_call.1']
    #allocation7 [shape = 'u8[8192]{0}', space=vmem, size = 0x2000, scoped, tag = 'input window, operand 3']
    #allocation8 [shape = 'u8[65536]{0}', space=vmem, size = 0x10000, scoped, tag = 'input window, operand 4']
    #allocation9 [shape = 'u8[131072]{0}', space=vmem, size = 0x20000, scoped, tag = 'input window, operand 5']
    #allocation10 [shape = 's32[2]{0}', space=sflag, size = 0x8, scoped, tag = 'scoped memory for tpu_custom_call.1']
    #allocation11 [shape = 'u8[131072]{0}', space=vmem, size = 0x20000, scoped, tag = 'input window, operand 7']
    #allocation12 [shape = 'u8[8192]{0}', space=vmem, size = 0x2000, scoped, tag = 'output window, operand 0, single buffered']
    %14 = vsyncpa [#allocation6], 0
    %15 = vsyncpa [#allocation4], 0
    %s16 = scalar_lea.sflag [#allocation4], 1
    %17 = vsyncpa %s16, 0
    %18 = vsyncpa [#allocation10], 0
    %s19 = scalar_lea.sflag [#allocation10], 1
    %20 = vsyncpa %s19, 0
    %21 = vsyncpa [#allocation5], 0
    loop: start=0, step=1, limit=11
    $region2: #{tpu_custom_call.1} parent=1 // loop_pre_header
      _
    $region3: #{tpu_custom_call.1} parent=1 // loop_header
      %s23 = sphi 0, %s27
      %p24 = scmp.ge.s32.totalorder %s23, 11
      %s30 = sphi 0, %s42
      %s31 = sphi 0, %s38
      %s32 = sphi 0, %s30
      %s33 = sphi 0, %s31
      %s34 = sphi 0, %s32
      %s35 = sphi 0, %s33
      %s43 = sphi 0, %s43
      %s45 = sphi 0, %s43
      %s46 = sphi 0, %s45
      %s60 = sphi 0, %s46
      %s64 = sphi 0, %s64
      %s66 = sphi 0, %s64
      %s67 = sphi 0, %s66
      %s81 = sphi 0, %s67
      %s87 = sphi 0, %s89
      %s90 = sphi 0, %s87
      %s91 = sphi 0, %s90
      %s107 = sphi 0, %s91
      %s113 = sphi 0, %s115
      %s116 = sphi 0, %s113
      %s117 = sphi 0, %s116
      %s133 = sphi 0, %s117
      %s141 = sphi 0, %s143
      %s144 = sphi 0, %s141
      %s145 = sphi 0, %s144
      %s161 = sphi 0, %s145
      %s167 = sphi 0, %s169
      %s170 = sphi 0, %s167
      %s171 = sphi 0, %s170
      %s187 = sphi 0, %s171
      %s193 = sphi 0, %s195
      %s196 = sphi 0, %s193
      %s197 = sphi 0, %s196
      %s213 = sphi 0, %s197
      %s219 = sphi 0, %s221
      %s222 = sphi 0, %s219
      %s223 = sphi 0, %s222
      %s239 = sphi 0, %s223
      %s245 = sphi 0, %s247
      %s248 = sphi 0, %s245
      %s249 = sphi 0, %s248
      %s265 = sphi 0, %s249
      %s269 = sphi 0, %s269
      %s271 = sphi 0, %s269
      %s272 = sphi 0, %s271
      %s286 = sphi 0, %s272
    $region4: #{tpu_custom_call.1} parent=1 // loop_header_branch
      %26 = sbr.rel (%p24) target = $region8
    $region5: #{tpu_custom_call.1} parent=1 // loop_body
      %s28 = ssub.s32 %s23, 1
      %s29 = ssub.s32 %s23, 2
      %s36 = sadd.s32 1, %s31
      %p37 = scmp.ge.s32.totalorder %s36, 3
      %s38 = scalar_select %p37, 0, %s36
      %s39 = sadd.s32 1, %s30
      %s40 = scalar_select %p37, %s39, %s30
      %p41 = scmp.ge.s32.totalorder %s40, 3
      %s42 = scalar_select %p41, 0, %s40
      %s44 = sadd.s32 %s43, 1
      %p47 = scmp.eq.s32.totalorder %s23, 8
      %p48 = scmp.ne.s32.totalorder %s43, %s45
      %p49 = scmp.eq.s32.totalorder %s23, 0
      %p50 = por %p48, %p49
      %p51 = scmp.ne.s32.totalorder %s43, %s45
      %p52 = scmp.eq.s32.totalorder %s28, 8
      %p53 = por %p51, %p52
      %p54 = scmp.ne.s32.totalorder %s45, %s46
      %p55 = scmp.eq.s32.totalorder %s28, 0
      %p56 = por %p54, %p55
      %p57 = scmp.ne.s32.totalorder %s45, %s46
      %p58 = scmp.eq.s32.totalorder %s29, 8
      %p59 = por %p57, %p58
      %p61 = scmp.ne.s32.totalorder %s46, %s60
      %p62 = scmp.eq.s32.totalorder %s29, 0
      %p63 = por %p61, %p62
      %s65 = sadd.s32 %s64, 1
      %p68 = scmp.eq.s32.totalorder %s23, 8
      %p69 = scmp.ne.s32.totalorder %s64, %s66
      %p70 = scmp.eq.s32.totalorder %s23, 0
      %p71 = por %p69, %p70
      %p72 = scmp.ne.s32.totalorder %s64, %s66
      %p73 = scmp.eq.s32.totalorder %s28, 8
      %p74 = por %p72, %p73
      %p75 = scmp.ne.s32.totalorder %s66, %s67
      %p76 = scmp.eq.s32.totalorder %s28, 0
      %p77 = por %p75, %p76
      %p78 = scmp.ne.s32.totalorder %s66, %s67
      %p79 = scmp.eq.s32.totalorder %s29, 8
      %p80 = por %p78, %p79
      %p82 = scmp.ne.s32.totalorder %s67, %s81
      %p83 = scmp.eq.s32.totalorder %s29, 0
      %p84 = por %p82, %p83
      %s85 = ssub.s32 %s31, %s38
      %p86 = scmp.eq.s32.totalorder %s85, 0
      %s88 = sadd.s32 %s87, 1
      %s89 = scalar_select %p86, %s87, %s88
      %p92 = pneg %p86
      %p93 = scmp.eq.s32.totalorder %s23, 8
      %p94 = por %p92, %p93
      %p95 = scmp.ne.s32.totalorder %s87, %s90
      %p96 = scmp.eq.s32.totalorder %s23, 0
      %p97 = por %p95, %p96
      %p98 = scmp.ne.s32.totalorder %s87, %s90
      %p99 = scmp.eq.s32.totalorder %s28, 8
      %p100 = por %p98, %p99
      %p101 = scmp.ne.s32.totalorder %s90, %s91
      %p102 = scmp.eq.s32.totalorder %s28, 0
      %p103 = por %p101, %p102
      %p104 = scmp.ne.s32.totalorder %s90, %s91
      %p105 = scmp.eq.s32.totalorder %s29, 8
      %p106 = por %p104, %p105
      %p108 = scmp.ne.s32.totalorder %s91, %s107
      %p109 = scmp.eq.s32.totalorder %s29, 0
      %p110 = por %p108, %p109
      %s111 = ssub.s32 %s31, %s38
      %p112 = scmp.eq.s32.totalorder %s111, 0
      %s114 = sadd.s32 %s113, 1
      %s115 = scalar_select %p112, %s113, %s114
      %p118 = pneg %p112
      %p119 = scmp.eq.s32.totalorder %s23, 8
      %p120 = por %p118, %p119
      %p121 = scmp.ne.s32.totalorder %s113, %s116
      %p122 = scmp.eq.s32.totalorder %s23, 0
      %p123 = por %p121, %p122
      %p124 = scmp.ne.s32.totalorder %s113, %s116
      %p125 = scmp.eq.s32.totalorder %s28, 8
      %p126 = por %p124, %p125
      %p127 = scmp.ne.s32.totalorder %s116, %s117
      %p128 = scmp.eq.s32.totalorder %s28, 0
      %p129 = por %p127, %p128
      %p130 = scmp.ne.s32.totalorder %s116, %s117
      %p131 = scmp.eq.s32.totalorder %s29, 8
      %p132 = por %p130, %p131
      %p134 = scmp.ne.s32.totalorder %s117, %s133
      %p135 = scmp.eq.s32.totalorder %s29, 0
      %p136 = por %p134, %p135
      %s137 = ssub.s32 %s30, %s42
      %s138 = ssub.s32 %s31, %s38
      %s139 = sor.u32 %s137, %s138
      %p140 = scmp.eq.s32.totalorder %s139, 0
      %s142 = sadd.s32 %s141, 1
      %s143 = scalar_select %p140, %s141, %s142
      %p146 = pneg %p140
      %p147 = scmp.eq.s32.totalorder %s23, 8
      %p148 = por %p146, %p147
      %p149 = scmp.ne.s32.totalorder %s141, %s144
      %p150 = scmp.eq.s32.totalorder %s23, 0
      %p151 = por %p149, %p150
      %p152 = scmp.ne.s32.totalorder %s141, %s144
      %p153 = scmp.eq.s32.totalorder %s28, 8
      %p154 = por %p152, %p153
      %p155 = scmp.ne.s32.totalorder %s144, %s145
      %p156 = scmp.eq.s32.totalorder %s28, 0
      %p157 = por %p155, %p156
      %p158 = scmp.ne.s32.totalorder %s144, %s145
      %p159 = scmp.eq.s32.totalorder %s29, 8
      %p160 = por %p158, %p159
      %p162 = scmp.ne.s32.totalorder %s145, %s161
      %p163 = scmp.eq.s32.totalorder %s29, 0
      %p164 = por %p162, %p163
      %s165 = ssub.s32 %s30, %s42
      %p166 = scmp.eq.s32.totalorder %s165, 0
      %s168 = sadd.s32 %s167, 1
      %s169 = scalar_select %p166, %s167, %s168
      %p172 = pneg %p166
      %p173 = scmp.eq.s32.totalorder %s23, 8
      %p174 = por %p172, %p173
      %p175 = scmp.ne.s32.totalorder %s167, %s170
      %p176 = scmp.eq.s32.totalorder %s23, 0
      %p177 = por %p175, %p176
      %p178 = scmp.ne.s32.totalorder %s167, %s170
      %p179 = scmp.eq.s32.totalorder %s28, 8
      %p180 = por %p178, %p179
      %p181 = scmp.ne.s32.totalorder %s170, %s171
      %p182 = scmp.eq.s32.totalorder %s28, 0
      %p183 = por %p181, %p182
      %p184 = scmp.ne.s32.totalorder %s170, %s171
      %p185 = scmp.eq.s32.totalorder %s29, 8
      %p186 = por %p184, %p185
      %p188 = scmp.ne.s32.totalorder %s171, %s187
      %p189 = scmp.eq.s32.totalorder %s29, 0
      %p190 = por %p188, %p189
      %s191 = ssub.s32 %s30, %s42
      %p192 = scmp.eq.s32.totalorder %s191, 0
      %s194 = sadd.s32 %s193, 1
      %s195 = scalar_select %p192, %s193, %s194
      %p198 = pneg %p192
      %p199 = scmp.eq.s32.totalorder %s23, 8
      %p200 = por %p198, %p199
      %p201 = scmp.ne.s32.totalorder %s193, %s196
      %p202 = scmp.eq.s32.totalorder %s23, 0
      %p203 = por %p201, %p202
      %p204 = scmp.ne.s32.totalorder %s193, %s196
      %p205 = scmp.eq.s32.totalorder %s28, 8
      %p206 = por %p204, %p205
      %p207 = scmp.ne.s32.totalorder %s196, %s197
      %p208 = scmp.eq.s32.totalorder %s28, 0
      %p209 = por %p207, %p208
      %p210 = scmp.ne.s32.totalorder %s196, %s197
      %p211 = scmp.eq.s32.totalorder %s29, 8
      %p212 = por %p210, %p211
      %p214 = scmp.ne.s32.totalorder %s197, %s213
      %p215 = scmp.eq.s32.totalorder %s29, 0
      %p216 = por %p214, %p215
      %s217 = ssub.s32 %s30, %s42
      %p218 = scmp.eq.s32.totalorder %s217, 0
      %s220 = sadd.s32 %s219, 1
      %s221 = scalar_select %p218, %s219, %s220
      %p224 = pneg %p218
      %p225 = scmp.eq.s32.totalorder %s23, 8
      %p226 = por %p224, %p225
      %p227 = scmp.ne.s32.totalorder %s219, %s222
      %p228 = scmp.eq.s32.totalorder %s23, 0
      %p229 = por %p227, %p228
      %p230 = scmp.ne.s32.totalorder %s219, %s222
      %p231 = scmp.eq.s32.totalorder %s28, 8
      %p232 = por %p230, %p231
      %p233 = scmp.ne.s32.totalorder %s222, %s223
      %p234 = scmp.eq.s32.totalorder %s28, 0
      %p235 = por %p233, %p234
      %p236 = scmp.ne.s32.totalorder %s222, %s223
      %p237 = scmp.eq.s32.totalorder %s29, 8
      %p238 = por %p236, %p237
      %p240 = scmp.ne.s32.totalorder %s223, %s239
      %p241 = scmp.eq.s32.totalorder %s29, 0
      %p242 = por %p240, %p241
      %s243 = ssub.s32 %s30, %s42
      %p244 = scmp.eq.s32.totalorder %s243, 0
      %s246 = sadd.s32 %s245, 1
      %s247 = scalar_select %p244, %s245, %s246
      %p250 = pneg %p244
      %p251 = scmp.eq.s32.totalorder %s23, 8
      %p252 = por %p250, %p251
      %p253 = scmp.ne.s32.totalorder %s245, %s248
      %p254 = scmp.eq.s32.totalorder %s23, 0
      %p255 = por %p253, %p254
      %p256 = scmp.ne.s32.totalorder %s245, %s248
      %p257 = scmp.eq.s32.totalorder %s28, 8
      %p258 = por %p256, %p257
      %p259 = scmp.ne.s32.totalorder %s248, %s249
      %p260 = scmp.eq.s32.totalorder %s28, 0
      %p261 = por %p259, %p260
      %p262 = scmp.ne.s32.totalorder %s248, %s249
      %p263 = scmp.eq.s32.totalorder %s29, 8
      %p264 = por %p262, %p263
      %p266 = scmp.ne.s32.totalorder %s249, %s265
      %p267 = scmp.eq.s32.totalorder %s29, 0
      %p268 = por %p266, %p267
      %s270 = sadd.s32 %s269, 1
      %p273 = scmp.eq.s32.totalorder %s23, 8
      %p274 = scmp.ne.s32.totalorder %s269, %s271
      %p275 = scmp.eq.s32.totalorder %s23, 0
      %p276 = por %p274, %p275
      %p277 = scmp.ne.s32.totalorder %s269, %s271
      %p278 = scmp.eq.s32.totalorder %s28, 8
      %p279 = por %p277, %p278
      %p280 = scmp.ne.s32.totalorder %s271, %s272
      %p281 = scmp.eq.s32.totalorder %s28, 0
      %p282 = por %p280, %p281
      %p283 = scmp.ne.s32.totalorder %s271, %s272
      %p284 = scmp.eq.s32.totalorder %s29, 8
      %p285 = por %p283, %p284
      %p287 = scmp.ne.s32.totalorder %s272, %s286
      %p288 = scmp.eq.s32.totalorder %s29, 0
      %p289 = por %p287, %p288
      %p290 = scmp.le.s32.totalorder 1, %s23
      %p291 = scmp.lt.s32.totalorder %s23, 10
      %p292 = pnand %p290, %p291
      %p293 = pneg %p292
      // Predicated region
      $region9: #{tpu_custom_call.1} parent=5 // pred_check
        _
      $region10: #{tpu_custom_call.1} parent=5 // pred_check_branch
        %295 = sbr.rel (%p292) target = $region12
      $region11: #{tpu_custom_call.1} parent=5 // pred_region
        %s296 = ssub.s32 %s23, 1
        // Predicated region
        $region13: #{tpu_custom_call.1} parent=11 // pred_check
          %p297 = pneg %p56
        $region14: #{tpu_custom_call.1} parent=11 // pred_check_branch
          %299 = sbr.rel (%p297) target = $region16
        $region15: #{tpu_custom_call.1} parent=11 // pred_region
          %s301 = ssub.s32 16, 16
          %302 = vsyncadd [#allocation6], %s301
          %s304 = sshll.u32 %s0, 4
          %s305 = int_to_ptr.vmem [resolvable:$true] %s304
          %307 = dma.vmem_to_smem %s305, 16, [#allocation3], [#allocation6]
        $region16: #{tpu_custom_call.1} parent=11 // pred_fallthru
          _
        // Predicated region
        $region17: #{tpu_custom_call.1} parent=11 // pred_check
          %p308 = pneg %p77
        $region18: #{tpu_custom_call.1} parent=11 // pred_check_branch
          %310 = sbr.rel (%p308) target = $region20
        $region19: #{tpu_custom_call.1} parent=11 // pred_region
          _
        $region20: #{tpu_custom_call.1} parent=11 // pred_fallthru
          _
      $region12: #{tpu_custom_call.1} parent=5 // pred_fallthru
        _
      %p311 = scmp.lt.s32.totalorder %s23, 9
      // Predicated region
      $region21: #{tpu_custom_call.1} parent=5 // pred_check
        %p312 = pneg %p311
      $region22: #{tpu_custom_call.1} parent=5 // pred_check_branch
        %314 = sbr.rel (%p312) target = $region24
      $region23: #{tpu_custom_call.1} parent=5 // pred_region
        // Predicated region
        $region25: #{tpu_custom_call.1} parent=23 // pred_check
          %p315 = pneg %p97
        $region26: #{tpu_custom_call.1} parent=23 // pred_check_branch
          %317 = sbr.rel (%p315) target = $region28
        $region27: #{tpu_custom_call.1} parent=23 // pred_region
          %s318 = smul.u32 16, %s31
          %p319 = scmp.lt.s32.totalorder %s318, 47
          %s320 = scalar_select %p319, %s318, 47
          %s321 = smul.addr %s320, 4
          %s322 = scalar_lea.vmem %s2, %s321
          %s323 = smul.u32 16, %s31
        $region28: #{tpu_custom_call.1} parent=23 // pred_fallthru
          _
        // Predicated region
        $region29: #{tpu_custom_call.1} parent=23 // pred_check
          %p324 = pneg %p123
        $region30: #{tpu_custom_call.1} parent=23 // pred_check_branch
          %326 = sbr.rel (%p324) target = $region32
        $region31: #{tpu_custom_call.1} parent=23 // pred_region
          %s327 = sand.u32 %s113, 1
          %s328 = sand.u32 %s113, 1
          %s329 = smul.addr %s328, 8
          %s330 = scalar_lea.vmem [#allocation7], %s329
          %s331 = smul.addr %s31, 4
          %s332 = scalar_lea.vmem %s3, %s331
          // Predicated region
          $region33: #{tpu_custom_call.1} parent=31 // pred_check
            _
          $region34: #{tpu_custom_call.1} parent=31 // pred_check_branch
            %334 = sbr.rel (0) target = $region36
          $region35: #{tpu_custom_call.1} parent=31 // pred_region
            // Predicated region
            $region37: #{tpu_custom_call.1} parent=35 // pred_check
              _
            $region38: #{tpu_custom_call.1} parent=35 // pred_check_branch
              %336 = sbr.rel target = $region40
            $region39: #{tpu_custom_call.1} parent=35 // pred_region
              // Predicated region
              $region52: #{tpu_custom_call.1} parent=39 // pred_check
                _
              $region53: #{tpu_custom_call.1} parent=39 // pred_check_branch
                %353 = sbr.rel (0) target = $region55
              $region54: #{tpu_custom_call.1} parent=39 // pred_region
                loop: start=0, step=1, limit=1
                $region56: #{tpu_custom_call.1} parent=54 // loop_pre_header
                  _
                $region57: #{tpu_custom_call.1} parent=54 // loop_header
                  %s355 = sphi 0, %s359
                  %p356 = scmp.ge.s32.totalorder %s355, 1
                  %s360 = sphi %s332, %s332
                  %s361 = sphi %s330, %s330
                $region58: #{tpu_custom_call.1} parent=54 // loop_header_branch
                  %358 = sbr.rel (%p356) target = $region62
                $region59: #{tpu_custom_call.1} parent=54 // loop_body
                  _
                $region60: #{tpu_custom_call.1} parent=54 // loop_footer
                  %s359 = sadd.s32 1, %s355
                $region61: #{tpu_custom_call.1} parent=54 // loop_footer_branch
                  %354 = sbr.rel target = $region57
                $region62: #{tpu_custom_call.1} parent=54 // loop_exit
                  _
                loop: start=0, step=1, limit=1
                $region63: #{tpu_custom_call.1} parent=54 // loop_pre_header
                  _
                $region64: #{tpu_custom_call.1} parent=54 // loop_header
                  %s364 = sphi 0, %s368
                  %p365 = scmp.ge.s32.totalorder %s364, 1
                  %s369 = sphi %s332, %s332
                  %s370 = sphi %s330, %s330
                $region65: #{tpu_custom_call.1} parent=54 // loop_header_branch
                  %367 = sbr.rel (%p365) target = $region69
                $region66: #{tpu_custom_call.1} parent=54 // loop_body
                  %v371 = vld [vmem:[%s369] sm:$0xf]
                  %372 = vst [vmem:[%s370] sm:$0xf] %v371
                  %v373 = vld [vmem:[%s369 + $0xc] sm:$0xf]
                  %374 = vst [vmem:[%s370 + $0x4] sm:$0xf] %v373
                $region67: #{tpu_custom_call.1} parent=54 // loop_footer
                  %s368 = sadd.s32 1, %s364
                $region68: #{tpu_custom_call.1} parent=54 // loop_footer_branch
                  %363 = sbr.rel target = $region64
                $region69: #{tpu_custom_call.1} parent=54 // loop_exit
                  _
              $region55: #{tpu_custom_call.1} parent=39 // pred_fallthru
                _
            $region40: #{tpu_custom_call.1} parent=35 // pred_fallthru
              _
            // Predicated region
            $region41: #{tpu_custom_call.1} parent=35 // pred_check
              _
            $region42: #{tpu_custom_call.1} parent=35 // pred_check_branch
              %338 = sbr.rel (0) target = $region44
            $region43: #{tpu_custom_call.1} parent=35 // pred_region
              loop: start=0, step=1, limit=1
              $region45: #{tpu_custom_call.1} parent=43 // loop_pre_header
                _
              $region46: #{tpu_custom_call.1} parent=43 // loop_header
                %s341 = sphi 0, %s345
                %p342 = scmp.ge.s32.totalorder %s341, 1
                %s346 = sphi %s332, %s332
                %s347 = sphi %s330, %s330
              $region47: #{tpu_custom_call.1} parent=43 // loop_header_branch
                %344 = sbr.rel (%p342) target = $region51
              $region48: #{tpu_custom_call.1} parent=43 // loop_body
                %v348 = vld [vmem:[%s346] sm:$0xf]
                %349 = vst [vmem:[%s347] sm:$0xf] %v348
                %v350 = vld [vmem:[%s346 + $0xc] sm:$0xf]
                %351 = vst [vmem:[%s347 + $0x4] sm:$0xf] %v350
              $region49: #{tpu_custom_call.1} parent=43 // loop_footer
                %s345 = sadd.s32 1, %s341
              $region50: #{tpu_custom_call.1} parent=43 // loop_footer_branch
                %340 = sbr.rel target = $region46
              $region51: #{tpu_custom_call.1} parent=43 // loop_exit
                _
            $region44: #{tpu_custom_call.1} parent=35 // pred_fallthru
              _
          $region36: #{tpu_custom_call.1} parent=31 // pred_fallthru
            _
          %375 = vnop
        $region32: #{tpu_custom_call.1} parent=23 // pred_fallthru
          _
        // Predicated region
        $region70: #{tpu_custom_call.1} parent=23 // pred_check
          %p376 = pneg %p151
        $region71: #{tpu_custom_call.1} parent=23 // pred_check_branch
          %378 = sbr.rel (%p376) target = $region73
        $region72: #{tpu_custom_call.1} parent=23 // pred_region
          %s379 = sand.u32 %s141, 1
          %s380 = scalar_lea.sflag [#allocation4], %s379
          %s381 = sand.u32 %s141, 1
          %s382 = smul.addr %s381, 64
          %s383 = scalar_lea.vmem [#allocation8], %s382
          %s384 = smul.u32 16, %s31
          %s386 = ssub.s32 1024, 1024
          %387 = vsyncadd %s380, %s386
          %s388 = smul.addr %s30, 48
          %s389 = sadd.s32 %s384, %s388
          %s390 = smul.addr %s389, 64
          %s391 = scalar_lea.hbm %s4, %s390
          %s392 = sshll.u32 %s383, 4
          %s393 = int_to_ptr.vmem [resolvable:$true] %s392
          %398 = dma.hbm_to_vmem [thread:$0]  %s391, 1024, %s393, %s380, 64, 64, 4
        $region73: #{tpu_custom_call.1} parent=23 // pred_fallthru
          _
        // Predicated region
        $region74: #{tpu_custom_call.1} parent=23 // pred_check
          %p399 = pneg %p177
        $region75: #{tpu_custom_call.1} parent=23 // pred_check_branch
          %401 = sbr.rel (%p399) target = $region77
        $region76: #{tpu_custom_call.1} parent=23 // pred_region
          %s402 = sand.u32 %s23, 1
          %s403 = scalar_lea.sflag [#allocation10], %s402
          %s404 = sand.u32 %s167, 1
          %s405 = smul.addr %s404, 128
          %s406 = scalar_lea.vmem [#allocation9], %s405
          %s408 = ssub.s32 2048, 2048
          %409 = vsyncadd %s403, %s408
          %s410 = smul.addr %s30, 16
          %s411 = smul.addr %s410, 128
          %s412 = scalar_lea.hbm %s5, %s411
          %s413 = sshll.u32 %s406, 4
          %s414 = int_to_ptr.vmem [resolvable:$true] %s413
          %419 = dma.hbm_to_vmem [thread:$0]  %s412, 2048, %s414, %s403, 128, 128, 8
        $region77: #{tpu_custom_call.1} parent=23 // pred_fallthru
          _
        // Predicated region
        $region78: #{tpu_custom_call.1} parent=23 // pred_check
          %p420 = pneg %p203
        $region79: #{tpu_custom_call.1} parent=23 // pred_check_branch
          %422 = sbr.rel (%p420) target = $region81
        $region80: #{tpu_custom_call.1} parent=23 // pred_region
          %p423 = scmp.lt.s32.totalorder %s30, 2
          %s424 = scalar_select %p423, %s30, 2
          %s425 = scalar_lea.vmem %s6, %s424
        $region81: #{tpu_custom_call.1} parent=23 // pred_fallthru
          _
        // Predicated region
        $region82: #{tpu_custom_call.1} parent=23 // pred_check
          %p426 = pneg %p229
        $region83: #{tpu_custom_call.1} parent=23 // pred_check_branch
          %428 = sbr.rel (%p426) target = $region85
        $region84: #{tpu_custom_call.1} parent=23 // pred_region
          %s429 = sand.u32 %s23, 1
          %s430 = scalar_lea.sflag [#allocation10], %s429
          %s431 = sand.u32 %s219, 1
          %s432 = smul.addr %s431, 128
          %s433 = scalar_lea.vmem [#allocation11], %s432
          %s435 = ssub.s32 2048, 2048
          %436 = vsyncadd %s430, %s435
          %s437 = smul.addr %s30, 16
          %s438 = smul.addr %s437, 128
          %s439 = scalar_lea.hbm %s7, %s438
          %s440 = sshll.u32 %s433, 4
          %s441 = int_to_ptr.vmem [resolvable:$true] %s440
          %446 = dma.hbm_to_vmem [thread:$0]  %s439, 2048, %s441, %s430, 128, 128, 8
        $region85: #{tpu_custom_call.1} parent=23 // pred_fallthru
          _
        // Predicated region
        $region86: #{tpu_custom_call.1} parent=23 // pred_check
          %p447 = pneg %p255
        $region87: #{tpu_custom_call.1} parent=23 // pred_check_branch
          %449 = sbr.rel (%p447) target = $region89
        $region88: #{tpu_custom_call.1} parent=23 // pred_region
          %p450 = scmp.lt.s32.totalorder %s30, 2
          %s451 = scalar_select %p450, %s30, 2
          %s452 = scalar_lea.vmem %s8, %s451
        $region89: #{tpu_custom_call.1} parent=23 // pred_fallthru
          _
      $region24: #{tpu_custom_call.1} parent=5 // pred_fallthru
        _
      %p453 = scmp.le.s32.totalorder 1, %s23
      %p454 = scmp.lt.s32.totalorder %s23, 10
      %p455 = pnand %p453, %p454
      %p456 = pneg %p455
      // Predicated region
      $region90: #{tpu_custom_call.1} parent=5 // pred_check
        _
      $region91: #{tpu_custom_call.1} parent=5 // pred_check_branch
        %458 = sbr.rel (%p455) target = $region93
      $region92: #{tpu_custom_call.1} parent=5 // pred_region
        %s459 = ssub.s32 %s23, 1
        // Predicated region
        $region94: #{tpu_custom_call.1} parent=92 // pred_check
          %p460 = pneg %p56
        $region95: #{tpu_custom_call.1} parent=92 // pred_check_branch
          %462 = sbr.rel (%p460) target = $region97
        $region96: #{tpu_custom_call.1} parent=92 // pred_region
          %463 = dma.done [#allocation6], 16
        $region97: #{tpu_custom_call.1} parent=92 // pred_fallthru
          _
        %s464 = sand.u32 %s116, 1
        %s465 = sand.u32 %s116, 1
        %s466 = smul.addr %s465, 8
        %s467 = scalar_lea.vmem [#allocation7], %s466
        // Predicated region
        $region98: #{tpu_custom_call.1} parent=92 // pred_check
          %p468 = pneg %p129
        $region99: #{tpu_custom_call.1} parent=92 // pred_check_branch
          %470 = sbr.rel (%p468) target = $region101
        $region100: #{tpu_custom_call.1} parent=92 // pred_region
          _
        $region101: #{tpu_custom_call.1} parent=92 // pred_fallthru
          _
        %s471 = sand.u32 %s144, 1
        %s472 = scalar_lea.sflag [#allocation4], %s471
        %s473 = sand.u32 %s144, 1
        %s474 = smul.addr %s473, 64
        %s475 = scalar_lea.vmem [#allocation8], %s474
        // Predicated region
        $region102: #{tpu_custom_call.1} parent=92 // pred_check
          %p476 = pneg %p157
        $region103: #{tpu_custom_call.1} parent=92 // pred_check_branch
          %478 = sbr.rel (%p476) target = $region105
        $region104: #{tpu_custom_call.1} parent=92 // pred_region
          %479 = dma.done %s472, 1024
        $region105: #{tpu_custom_call.1} parent=92 // pred_fallthru
          _
        %s480 = sand.u32 %s28, 1
        %s481 = scalar_lea.sflag [#allocation10], %s480
        %s482 = sand.u32 %s170, 1
        %s483 = smul.addr %s482, 128
        %s484 = scalar_lea.vmem [#allocation9], %s483
        // Predicated region
        $region106: #{tpu_custom_call.1} parent=92 // pred_check
          %p485 = pneg %p183
        $region107: #{tpu_custom_call.1} parent=92 // pred_check_branch
          %487 = sbr.rel (%p485) target = $region109
        $region108: #{tpu_custom_call.1} parent=92 // pred_region
          %488 = dma.done %s481, 2048
        $region109: #{tpu_custom_call.1} parent=92 // pred_fallthru
          _
        %s489 = sand.u32 %s28, 1
        %s490 = scalar_lea.sflag [#allocation10], %s489
        %s491 = sand.u32 %s222, 1
        %s492 = smul.addr %s491, 128
        %s493 = scalar_lea.vmem [#allocation11], %s492
        // Predicated region
        $region110: #{tpu_custom_call.1} parent=92 // pred_check
          %p494 = pneg %p235
        $region111: #{tpu_custom_call.1} parent=92 // pred_check_branch
          %496 = sbr.rel (%p494) target = $region113
        $region112: #{tpu_custom_call.1} parent=92 // pred_region
          %497 = dma.done %s490, 2048
        $region113: #{tpu_custom_call.1} parent=92 // pred_fallthru
          _
        %498 = sfence
        %p499 = pneg %p56
        %p500 = pneg %p53
        %p501 = pneg %p77
        %p502 = pneg %p74
        %s503 = smul.u32 16, %s33
        %p504 = scmp.lt.s32.totalorder %s503, 47
        %s505 = scalar_select %p504, %s503, 47
        %s506 = smul.addr %s505, 4
        %s507 = scalar_lea.vmem %s2, %s506
        %p508 = pneg %p103
        %p509 = pneg %p100
        %s510 = sand.u32 %s116, 1
        %s511 = sand.u32 %s116, 1
        %s512 = smul.addr %s511, 8
        %s513 = scalar_lea.vmem [#allocation7], %s512
        %p514 = pneg %p129
        %p515 = pneg %p126
        %s516 = sand.u32 %s144, 1
        %s517 = scalar_lea.sflag [#allocation4], %s516
        %s518 = sand.u32 %s144, 1
        %s519 = smul.addr %s518, 64
        %s520 = scalar_lea.vmem [#allocation8], %s519
        %p521 = pneg %p157
        %p522 = pneg %p154
        %s523 = sand.u32 %s28, 1
        %s524 = scalar_lea.sflag [#allocation10], %s523
        %s525 = sand.u32 %s170, 1
        %s526 = smul.addr %s525, 128
        %s527 = scalar_lea.vmem [#allocation9], %s526
        %p528 = pneg %p183
        %p529 = pneg %p180
        %p530 = scmp.lt.s32.totalorder %s32, 2
        %s531 = scalar_select %p530, %s32, 2
        %s532 = scalar_lea.vmem %s6, %s531
        %p533 = pneg %p209
        %p534 = pneg %p206
        %s535 = sand.u32 %s28, 1
        %s536 = scalar_lea.sflag [#allocation10], %s535
        %s537 = sand.u32 %s222, 1
        %s538 = smul.addr %s537, 128
        %s539 = scalar_lea.vmem [#allocation11], %s538
        %p540 = pneg %p235
        %p541 = pneg %p232
        %p542 = scmp.lt.s32.totalorder %s32, 2
        %s543 = scalar_select %p542, %s32, 2
        %s544 = scalar_lea.vmem %s8, %s543
        %p545 = pneg %p261
        %p546 = pneg %p258
        %p547 = pneg %p282
        %p548 = pneg %p279
        %s549 = smul.u32 16, %s33
        %p550 = scmp.lt.s32.totalorder %s549, 47
        %s551 = scalar_select %p550, %s549, 47
        %s552 = smul.addr %s551, 4
        %s553 = scalar_lea.vmem %s2, %s552
        %s554 = smul.u32 16, %s33
        %s555 = smul.u32 16, %s33
        %p556 = scmp.lt.s32.totalorder %s32, 2
        %s557 = scalar_select %p556, %s32, 2
        %s558 = scalar_lea.vmem %s6, %s557
        %p559 = scmp.lt.s32.totalorder %s32, 2
        %s560 = scalar_select %p559, %s32, 2
        %s561 = scalar_lea.vmem %s8, %s560
        %p563 = scmp.eq.s32.totalorder %s32, 0
        %p564 = scmp.eq.s32.totalorder %s33, 0
        %p565 = pnand %p563, %p564
        %p566 = pneg %p565
        // Predicated region
        $region114: #{tpu_custom_call.1} parent=92 // pred_check
          _
        $region115: #{tpu_custom_call.1} parent=92 // pred_check_branch
          %568 = sbr.rel (%p565) target = $region117
        $region116: #{tpu_custom_call.1} parent=92 // pred_region
          %v569 = vld [vmem:[%s1] sm:$0xff]
          %v570 = vld [vmem:[%s1 + $0x8] sm:$0xff]
          %571 = vst [vmem:[#allocation12] sm:$0xff] %v569
          %572 = vst [vmem:[#allocation12 + $0x8] sm:$0xff] %v570
        $region117: #{tpu_custom_call.1} parent=92 // pred_fallthru
          _
        // Predicated region
        $region118: #{tpu_custom_call.1} parent=92 // pred_check
          %p573 = pneg %p564
        $region119: #{tpu_custom_call.1} parent=92 // pred_check_branch
          %575 = sbr.rel (%p573) target = $region121
        $region120: #{tpu_custom_call.1} parent=92 // pred_region
          %576 = vst [vmem:[#allocation2] sm:$0xff] 0.0
          %577 = vst [vmem:[#allocation2 + $0x8] sm:$0xff] 0.0
        $region121: #{tpu_custom_call.1} parent=92 // pred_fallthru
          _
        %v578 = vld [vmem:[#allocation12] sm:$0xff]
        %v579 = vld [vmem:[#allocation12 + $0x8] sm:$0xff]
        %v580 = vpack.c.bf16 %v579, %v578
        %v581 = vld [vmem:[%s553] sm:$0xf]
        %v582 = vld [vmem:[%s553 + $0x4] sm:$0xf]
        %v583 = vld [vmem:[%s553 + $0x8] sm:$0xf]
        %v584 = vld [vmem:[%s553 + $0xc] sm:$0xf]
        %v585 = vld [vmem:[%s553 + $0x10] sm:$0xf]
        %v586 = vld [vmem:[%s553 + $0x14] sm:$0xf]
        %v587 = vld [vmem:[%s553 + $0x18] sm:$0xf]
        %v588 = vld [vmem:[%s553 + $0x1c] sm:$0xf]
        %v589 = vld [vmem:[%s553 + $0x20] sm:$0xf]
        %v590 = vld [vmem:[%s553 + $0x24] sm:$0xf]
        %v591 = vld [vmem:[%s553 + $0x28] sm:$0xf]
        %v592 = vld [vmem:[%s553 + $0x2c] sm:$0xf]
        %v593 = vld [vmem:[%s553 + $0x30] sm:$0xf]
        %v594 = vld [vmem:[%s553 + $0x34] sm:$0xf]
        %v595 = vld [vmem:[%s553 + $0x38] sm:$0xf]
        %v596 = vld [vmem:[%s553 + $0x3c] sm:$0xf]
        %v597 = vld [vmem:[%s475] sm:$0xf]
        %v598 = vld [vmem:[%s475 + $0x4] sm:$0xf]
        %v599 = vld [vmem:[%s475 + $0x8] sm:$0xf]
        %v600 = vld [vmem:[%s475 + $0xc] sm:$0xf]
        %v601 = vld [vmem:[%s475 + $0x10] sm:$0xf]
        %v602 = vld [vmem:[%s475 + $0x14] sm:$0xf]
        %v603 = vld [vmem:[%s475 + $0x18] sm:$0xf]
        %v604 = vld [vmem:[%s475 + $0x1c] sm:$0xf]
        %v605 = vld [vmem:[%s475 + $0x20] sm:$0xf]
        %v606 = vld [vmem:[%s475 + $0x24] sm:$0xf]
        %v607 = vld [vmem:[%s475 + $0x28] sm:$0xf]
        %v608 = vld [vmem:[%s475 + $0x2c] sm:$0xf]
        %v609 = vld [vmem:[%s475 + $0x30] sm:$0xf]
        %v610 = vld [vmem:[%s475 + $0x34] sm:$0xf]
        %v611 = vld [vmem:[%s475 + $0x38] sm:$0xf]
        %v612 = vld [vmem:[%s475 + $0x3c] sm:$0xf]
        %v613 = vunpack.c.l.bf16 %v597
        %v614 = vunpack.c.l.bf16 %v598
        %v615 = vunpack.c.l.bf16 %v599
        %v616 = vunpack.c.l.bf16 %v600
        %v617 = vunpack.c.l.bf16 %v601
        %v618 = vunpack.c.l.bf16 %v602
        %v619 = vunpack.c.l.bf16 %v603
        %v620 = vunpack.c.l.bf16 %v604
        %v621 = vunpack.c.l.bf16 %v605
        %v622 = vunpack.c.l.bf16 %v606
        %v623 = vunpack.c.l.bf16 %v607
        %v624 = vunpack.c.l.bf16 %v608
        %v625 = vunpack.c.l.bf16 %v609
        %v626 = vunpack.c.l.bf16 %v610
        %v627 = vunpack.c.l.bf16 %v611
        %v628 = vunpack.c.l.bf16 %v612
        %v645 = vunpack.c.l.b16 %v581
        %v646 = vunpack.c.l.b16 %v582
        %v647 = vunpack.c.l.b16 %v583
        %v648 = vunpack.c.l.b16 %v584
        %v649 = vunpack.c.l.b16 %v585
        %v650 = vunpack.c.l.b16 %v586
        %v651 = vunpack.c.l.b16 %v587
        %v652 = vunpack.c.l.b16 %v588
        %v653 = vunpack.c.l.b16 %v589
        %v654 = vunpack.c.l.b16 %v590
        %v655 = vunpack.c.l.b16 %v591
        %v656 = vunpack.c.l.b16 %v592
        %v657 = vunpack.c.l.b16 %v593
        %v658 = vunpack.c.l.b16 %v594
        %v659 = vunpack.c.l.b16 %v595
        %v660 = vunpack.c.l.b16 %v596
        %v661 = vpack.c.b16 %v646, %v645
        %v662 = vpack.c.b16 %v648, %v647
        %v663 = vpack.c.b16 %v650, %v649
        %v664 = vpack.c.b16 %v652, %v651
        %v665 = vpack.c.b16 %v654, %v653
        %v666 = vpack.c.b16 %v656, %v655
        %v667 = vpack.c.b16 %v658, %v657
        %v668 = vpack.c.b16 %v660, %v659
        %vm669 = vcmask 130048
        %v671 = vsel %vm669, %v661, 0
        %v674 = vsel %vm669, %v662, 0
        %v677 = vsel %vm669, %v663, 0
        %v680 = vsel %vm669, %v664, 0
        %v683 = vsel %vm669, %v665, 0
        %v686 = vsel %vm669, %v666, 0
        %v689 = vsel %vm669, %v667, 0
        %v692 = vsel %vm669, %v668, 0
        %694 = vmatprep.subr.bf16.mxu0 0
        %695 = vmatpush1.bf16.msra.mxu0 %v580
        %696 = vmatprep.subr.bf16.mxu0 0
        %697 = vmatpush1.bf16.msra.mxu0 0
        %698 = vmatprep.subr.bf16.mxu0 0
        %699 = vmatpush1.bf16.msra.mxu0 0
        %700 = vmatprep.subr.bf16.mxu0 0
        %701 = vmatpush1.bf16.msra.mxu0 0
        %702 = vmatprep.subr.bf16.mxu0 0
        %703 = vmatpush1.bf16.msra.mxu0 0
        %704 = vmatprep.subr.bf16.mxu0 0
        %705 = vmatpush1.bf16.msra.mxu0 0
        %706 = vmatprep.subr.bf16.mxu0 0
        %707 = vmatpush1.bf16.msra.mxu0 0
        %708 = vmatprep.subr.bf16.mxu0 0
        %709 = vmatpush1.bf16.msra.mxu0 0
        %710 = vmatprep.subr.bf16.mxu0 0
        %711 = vmatpush1.bf16.msra.mxu0 0
        %712 = vmatprep.subr.bf16.mxu0 0
        %713 = vmatpush1.bf16.msra.mxu0 0
        %714 = vmatprep.subr.bf16.mxu0 0
        %715 = vmatpush1.bf16.msra.mxu0 0
        %716 = vmatprep.subr.bf16.mxu0 0
        %717 = vmatpush1.bf16.msra.mxu0 0
        %718 = vmatprep.subr.bf16.mxu0 0
        %719 = vmatpush1.bf16.msra.mxu0 0
        %720 = vmatprep.subr.bf16.mxu0 0
        %721 = vmatpush1.bf16.msra.mxu0 0
        %722 = vmatprep.subr.bf16.mxu0 0
        %723 = vmatpush1.bf16.msra.mxu0 0
        %724 = vmatprep.subr.bf16.mxu0 0
        %725 = vmatpush1.bf16.msra.mxu0 0
        %726 = vmatprep.mubr.bf16.mxu0 0
        %727 = vmatmul.mubr.bf16.gmra.mrb[0].mxu0 %v671
        %v728 = vpop.f32.mrb[0].mxu0
        %v729 = vadd.f32 %v613, %v728
        %v730 = vpop.f32.mrb[0].mxu0
        %v731 = vpop.f32.mrb[0].mxu0
        %v732 = vadd.f32 %v614, %v731
        %v733 = vpop.f32.mrb[0].mxu0
        %734 = vmatprep.mubr.bf16.mxu0 0
        %735 = vmatmul.mubr.bf16.gmra.mrb[0].mxu0 %v674
        %v736 = vpop.f32.mrb[0].mxu0
        %v737 = vadd.f32 %v615, %v736
        %v738 = vpop.f32.mrb[0].mxu0
        %v739 = vpop.f32.mrb[0].mxu0
        %v740 = vadd.f32 %v616, %v739
        %v741 = vpop.f32.mrb[0].mxu0
        %742 = vmatprep.mubr.bf16.mxu0 0
        %743 = vmatmul.mubr.bf16.gmra.mrb[0].mxu0 %v677
        %v744 = vpop.f32.mrb[0].mxu0
        %v745 = vadd.f32 %v617, %v744
        %v746 = vpop.f32.mrb[0].mxu0
        %v747 = vpop.f32.mrb[0].mxu0
        %v748 = vadd.f32 %v618, %v747
        %v749 = vpop.f32.mrb[0].mxu0
        %750 = vmatprep.mubr.bf16.mxu0 0
        %751 = vmatmul.mubr.bf16.gmra.mrb[0].mxu0 %v680
        %v752 = vpop.f32.mrb[0].mxu0
        %v753 = vadd.f32 %v619, %v752
        %v754 = vpop.f32.mrb[0].mxu0
        %v755 = vpop.f32.mrb[0].mxu0
        %v756 = vadd.f32 %v620, %v755
        %v757 = vpop.f32.mrb[0].mxu0
        %758 = vmatprep.mubr.bf16.mxu0 0
        %759 = vmatmul.mubr.bf16.gmra.mrb[0].mxu0 %v683
        %v760 = vpop.f32.mrb[0].mxu0
        %v761 = vadd.f32 %v621, %v760
        %v762 = vpop.f32.mrb[0].mxu0
        %v763 = vpop.f32.mrb[0].mxu0
        %v764 = vadd.f32 %v622, %v763
        %v765 = vpop.f32.mrb[0].mxu0
        %766 = vmatprep.mubr.bf16.mxu0 0
        %767 = vmatmul.mubr.bf16.gmra.mrb[0].mxu0 %v686
        %v768 = vpop.f32.mrb[0].mxu0
        %v769 = vadd.f32 %v623, %v768
        %v770 = vpop.f32.mrb[0].mxu0
        %v771 = vpop.f32.mrb[0].mxu0
        %v772 = vadd.f32 %v624, %v771
        %v773 = vpop.f32.mrb[0].mxu0
        %774 = vmatprep.mubr.bf16.mxu0 0
        %775 = vmatmul.mubr.bf16.gmra.mrb[0].mxu0 %v689
        %v776 = vpop.f32.mrb[0].mxu0
        %v777 = vadd.f32 %v625, %v776
        %v778 = vpop.f32.mrb[0].mxu0
        %v779 = vpop.f32.mrb[0].mxu0
        %v780 = vadd.f32 %v626, %v779
        %v781 = vpop.f32.mrb[0].mxu0
        %782 = vmatprep.mubr.bf16.mxu0 0
        %783 = vmatmul.mubr.bf16.gmra.mrb[0].mxu0 %v692
        %v784 = vpop.f32.mrb[0].mxu0
        %v785 = vadd.f32 %v627, %v784
        %v786 = vpop.f32.mrb[0].mxu0
        %v787 = vpop.f32.mrb[0].mxu0
        %v788 = vadd.f32 %v628, %v787
        %v789 = vpop.f32.mrb[0].mxu0
        %790 = vdwg.mxu0
        %v791 = vmax.f32 %v729, 0.0
        %v792 = vmax.f32 %v732, 0.0
        %v793 = vmax.f32 %v737, 0.0
        %v794 = vmax.f32 %v740, 0.0
        %v795 = vmax.f32 %v745, 0.0
        %v796 = vmax.f32 %v748, 0.0
        %v797 = vmax.f32 %v753, 0.0
        %v798 = vmax.f32 %v756, 0.0
        %v799 = vmax.f32 %v761, 0.0
        %v800 = vmax.f32 %v764, 0.0
        %v801 = vmax.f32 %v769, 0.0
        %v802 = vmax.f32 %v772, 0.0
        %v803 = vmax.f32 %v777, 0.0
        %v804 = vmax.f32 %v780, 0.0
        %v805 = vmax.f32 %v785, 0.0
        %v806 = vmax.f32 %v788, 0.0
        %v807 = vld [vmem:[#allocation2] sm:$0xff]
        %v808 = vld [vmem:[#allocation2 + $0x8] sm:$0xff]
        %v809 = vld [vmem:[%s467] sm:$0xf]
        %v810 = vld [vmem:[%s467 + $0x4] sm:$0xf]
        %v811 = vpack.c.bf16 %v792, %v791
        %v812 = vpack.c.bf16 %v794, %v793
        %v813 = vpack.c.bf16 %v796, %v795
        %v814 = vpack.c.bf16 %v798, %v797
        %v815 = vpack.c.bf16 %v800, %v799
        %v816 = vpack.c.bf16 %v802, %v801
        %v817 = vpack.c.bf16 %v804, %v803
        %v818 = vpack.c.bf16 %v806, %v805
        %v821 = vunpack.c.l.b16 %v809
        %v822 = vunpack.c.l.b16 %v810
        %v823 = vpack.c.b16 %v822, %v821
        %825 = vmatprep.subr.bf16.mxu0 0
        %826 = vmatpush1.bf16.msra.mxu0 %v811
        %827 = vmatprep.subr.bf16.mxu0 0
        %828 = vmatpush1.bf16.msra.mxu0 %v812
        %829 = vmatprep.subr.bf16.mxu0 0
        %830 = vmatpush1.bf16.msra.mxu0 %v813
        %831 = vmatprep.subr.bf16.mxu0 0
        %832 = vmatpush1.bf16.msra.mxu0 %v814
        %833 = vmatprep.subr.bf16.mxu0 0
        %834 = vmatpush1.bf16.msra.mxu0 %v815
        %835 = vmatprep.subr.bf16.mxu0 0
        %836 = vmatpush1.bf16.msra.mxu0 %v816
        %837 = vmatprep.subr.bf16.mxu0 0
        %838 = vmatpush1.bf16.msra.mxu0 %v817
        %839 = vmatprep.subr.bf16.mxu0 0
        %840 = vmatpush1.bf16.msra.mxu0 %v818
        %841 = vmatprep.subr.bf16.mxu0 0
        %842 = vmatpush1.bf16.msra.mxu0 0
        %843 = vmatprep.subr.bf16.mxu0 0
        %844 = vmatpush1.bf16.msra.mxu0 0
        %845 = vmatprep.subr.bf16.mxu0 0
        %846 = vmatpush1.bf16.msra.mxu0 0
        %847 = vmatprep.subr.bf16.mxu0 0
        %848 = vmatpush1.bf16.msra.mxu0 0
        %849 = vmatprep.subr.bf16.mxu0 0
        %850 = vmatpush1.bf16.msra.mxu0 0
        %851 = vmatprep.subr.bf16.mxu0 0
        %852 = vmatpush1.bf16.msra.mxu0 0
        %853 = vmatprep.subr.bf16.mxu0 0
        %854 = vmatpush1.bf16.msra.mxu0 0
        %855 = vmatprep.subr.bf16.mxu0 0
        %856 = vmatpush1.bf16.msra.mxu0 0
        %857 = vmatprep.mubr.bf16.mxu0 0
        %858 = vmatmul.mubr.bf16.gmra.mrb[0].mxu0 %v823
        %v859 = vpop.f32.mrb[0].mxu0
        %v860 = vadd.f32 0.0, %v859
        %v861 = vpop.f32.mrb[0].mxu0
        %v862 = vpop.f32.mrb[0].mxu0
        %v863 = vadd.f32 0.0, %v862
        %v864 = vpop.f32.mrb[0].mxu0
        %865 = vdwg.mxu0
        %v866 = vadd.f32 %v807, %v860
        %v867 = vadd.f32 %v808, %v863
        %868 = vst [vmem:[#allocation2] sm:$0xff] %v866
        %869 = vst [vmem:[#allocation2 + $0x8] sm:$0xff] %v867
        %p870 = scmp.eq.s32.totalorder %s33, 2
        // Predicated region
        $region122: #{tpu_custom_call.1} parent=92 // pred_check
          %p871 = pneg %p870
        $region123: #{tpu_custom_call.1} parent=92 // pred_check_branch
          %873 = sbr.rel (%p871) target = $region125
        $region124: #{tpu_custom_call.1} parent=92 // pred_region
          %s874 = sld [smem:[#allocation3 + %s32]]
          %s875 = sadd.f32 %s874, 1.0
          %v876 = vstv %s875
          %v877 = vmul.f32 %v876, %v578
          %v878 = vmul.f32 %v876, %v579
          %v879 = vld [vmem:[#allocation2] sm:$0xff]
          %v880 = vld [vmem:[#allocation2 + $0x8] sm:$0xff]
          %v881 = vadd.f32 %v877, %v879
          %v882 = vadd.f32 %v878, %v880
          %v883 = vld [vmem:[%s484] sm:$0xff]
          %v884 = vld [vmem:[%s484 + $0x8] sm:$0xff]
          %v885 = vld [vmem:[%s484 + $0x10] sm:$0xff]
          %v886 = vld [vmem:[%s484 + $0x18] sm:$0xff]
          %v887 = vld [vmem:[%s484 + $0x20] sm:$0xff]
          %v888 = vld [vmem:[%s484 + $0x28] sm:$0xff]
          %v889 = vld [vmem:[%s484 + $0x30] sm:$0xff]
          %v890 = vld [vmem:[%s484 + $0x38] sm:$0xff]
          %v891 = vld [vmem:[%s484 + $0x40] sm:$0xff]
          %v892 = vld [vmem:[%s484 + $0x48] sm:$0xff]
          %v893 = vld [vmem:[%s484 + $0x50] sm:$0xff]
          %v894 = vld [vmem:[%s484 + $0x58] sm:$0xff]
          %v895 = vld [vmem:[%s484 + $0x60] sm:$0xff]
          %v896 = vld [vmem:[%s484 + $0x68] sm:$0xff]
          %v897 = vld [vmem:[%s484 + $0x70] sm:$0xff]
          %v898 = vld [vmem:[%s484 + $0x78] sm:$0xff]
          %v899 = vld [vmem:[%s558] sm:$0x1]
          %v901 = vlaneseq
          %v902 = vshrl.u32 %v901, 7
          %v903 = vsub.s32 0, %v902
          %v904 = vrot.slane %v899, %v903
          %906 = vmatprep.subr.mxu0 0.0
          %907 = vmatpush1.msra.mxu0 %v883
          %908 = vmatprep.subr.mxu0 0.0
          %909 = vmatpush1.msra.mxu0 %v884
          %910 = vmatprep.subr.mxu0 0.0
          %911 = vmatpush1.msra.mxu0 %v885
          %912 = vmatprep.subr.mxu0 0.0
          %913 = vmatpush1.msra.mxu0 %v886
          %914 = vmatprep.subr.mxu0 0.0
          %915 = vmatpush1.msra.mxu0 %v887
          %916 = vmatprep.subr.mxu0 0.0
          %917 = vmatpush1.msra.mxu0 %v888
          %918 = vmatprep.subr.mxu0 0.0
          %919 = vmatpush1.msra.mxu0 %v889
          %920 = vmatprep.subr.mxu0 0.0
          %921 = vmatpush1.msra.mxu0 %v890
          %922 = vmatprep.subr.mxu0 0.0
          %923 = vmatpush1.msra.mxu0 %v891
          %924 = vmatprep.subr.mxu0 0.0
          %925 = vmatpush1.msra.mxu0 %v892
          %926 = vmatprep.subr.mxu0 0.0
          %927 = vmatpush1.msra.mxu0 %v893
          %928 = vmatprep.subr.mxu0 0.0
          %929 = vmatpush1.msra.mxu0 %v894
          %930 = vmatprep.subr.mxu0 0.0
          %931 = vmatpush1.msra.mxu0 %v895
          %932 = vmatprep.subr.mxu0 0.0
          %933 = vmatpush1.msra.mxu0 %v896
          %934 = vmatprep.subr.mxu0 0.0
          %935 = vmatpush1.msra.mxu0 %v897
          %936 = vmatprep.subr.mxu0 0.0
          %937 = vmatpush1.msra.mxu0 %v898
          %938 = vmatprep.subr.mxu0 0.0
          %939 = vmatpush1.msra.mxu0 0.0
          %940 = vmatprep.subr.mxu0 0.0
          %941 = vmatpush1.msra.mxu0 0.0
          %942 = vmatprep.subr.mxu0 0.0
          %943 = vmatpush1.msra.mxu0 0.0
          %944 = vmatprep.subr.mxu0 0.0
          %945 = vmatpush1.msra.mxu0 0.0
          %946 = vmatprep.subr.mxu0 0.0
          %947 = vmatpush1.msra.mxu0 0.0
          %948 = vmatprep.subr.mxu0 0.0
          %949 = vmatpush1.msra.mxu0 0.0
          %950 = vmatprep.subr.mxu0 0.0
          %951 = vmatpush1.msra.mxu0 0.0
          %952 = vmatprep.subr.mxu0 0.0
          %953 = vmatpush1.msra.mxu0 0.0
          %954 = vmatprep.subr.mxu0 0.0
          %955 = vmatpush1.msra.mxu0 0.0
          %956 = vmatprep.subr.mxu0 0.0
          %957 = vmatpush1.msra.mxu0 0.0
          %958 = vmatprep.subr.mxu0 0.0
          %959 = vmatpush1.msra.mxu0 0.0
          %960 = vmatprep.subr.mxu0 0.0
          %961 = vmatpush1.msra.mxu0 0.0
          %962 = vmatprep.subr.mxu0 0.0
          %963 = vmatpush1.msra.mxu0 0.0
          %964 = vmatprep.subr.mxu0 0.0
          %965 = vmatpush1.msra.mxu0 0.0
          %966 = vmatprep.subr.mxu0 0.0
          %967 = vmatpush1.msra.mxu0 0.0
          %968 = vmatprep.subr.mxu0 0.0
          %969 = vmatpush1.msra.mxu0 0.0
          %970 = vmatprep.mubr.f32.mxu0 0.0
          %971 = vmatmul.mubr.f32.gmra.mrb[0].mxu0 %v881
          %v972 = vpop.f32.mrb[0].mxu0
          %v973 = vadd.f32 %v904, %v972
          %v974 = vpop.f32.mrb[0].mxu0
          %975 = vmatprep.mubr.f32.mxu0 0.0
          %976 = vmatmul.mubr.f32.gmra.mrb[0].mxu0 %v882
          %v977 = vpop.f32.mrb[0].mxu0
          %v978 = vadd.f32 %v904, %v977
          %v979 = vpop.f32.mrb[0].mxu0
          %980 = vdwg.mxu0
          %v981 = vmax.f32 %v973, 0.0
          %v982 = vmax.f32 %v978, 0.0
          %v983 = vld [vmem:[%s493] sm:$0xff]
          %v984 = vld [vmem:[%s493 + $0x8] sm:$0xff]
          %v985 = vld [vmem:[%s493 + $0x10] sm:$0xff]
          %v986 = vld [vmem:[%s493 + $0x18] sm:$0xff]
          %v987 = vld [vmem:[%s493 + $0x20] sm:$0xff]
          %v988 = vld [vmem:[%s493 + $0x28] sm:$0xff]
          %v989 = vld [vmem:[%s493 + $0x30] sm:$0xff]
          %v990 = vld [vmem:[%s493 + $0x38] sm:$0xff]
          %v991 = vld [vmem:[%s493 + $0x40] sm:$0xff]
          %v992 = vld [vmem:[%s493 + $0x48] sm:$0xff]
          %v993 = vld [vmem:[%s493 + $0x50] sm:$0xff]
          %v994 = vld [vmem:[%s493 + $0x58] sm:$0xff]
          %v995 = vld [vmem:[%s493 + $0x60] sm:$0xff]
          %v996 = vld [vmem:[%s493 + $0x68] sm:$0xff]
          %v997 = vld [vmem:[%s493 + $0x70] sm:$0xff]
          %v998 = vld [vmem:[%s493 + $0x78] sm:$0xff]
          %v999 = vld [vmem:[%s561] sm:$0x1]
          %v1001 = vlaneseq
          %v1002 = vshrl.u32 %v1001, 7
          %v1003 = vsub.s32 0, %v1002
          %v1004 = vrot.slane %v999, %v1003
          %1006 = vmatprep.subr.mxu0 0.0
          %1007 = vmatpush1.msra.mxu0 %v983
          %1008 = vmatprep.subr.mxu0 0.0
          %1009 = vmatpush1.msra.mxu0 %v984
          %1010 = vmatprep.subr.mxu0 0.0
          %1011 = vmatpush1.msra.mxu0 %v985
          %1012 = vmatprep.subr.mxu0 0.0
          %1013 = vmatpush1.msra.mxu0 %v986
          %1014 = vmatprep.subr.mxu0 0.0
          %1015 = vmatpush1.msra.mxu0 %v987
          %1016 = vmatprep.subr.mxu0 0.0
          %1017 = vmatpush1.msra.mxu0 %v988
          %1018 = vmatprep.subr.mxu0 0.0
          %1019 = vmatpush1.msra.mxu0 %v989
          %1020 = vmatprep.subr.mxu0 0.0
          %1021 = vmatpush1.msra.mxu0 %v990
          %1022 = vmatprep.subr.mxu0 0.0
          %1023 = vmatpush1.msra.mxu0 %v991
          %1024 = vmatprep.subr.mxu0 0.0
          %1025 = vmatpush1.msra.mxu0 %v992
          %1026 = vmatprep.subr.mxu0 0.0
          %1027 = vmatpush1.msra.mxu0 %v993
          %1028 = vmatprep.subr.mxu0 0.0
          %1029 = vmatpush1.msra.mxu0 %v994
          %1030 = vmatprep.subr.mxu0 0.0
          %1031 = vmatpush1.msra.mxu0 %v995
          %1032 = vmatprep.subr.mxu0 0.0
          %1033 = vmatpush1.msra.mxu0 %v996
          %1034 = vmatprep.subr.mxu0 0.0
          %1035 = vmatpush1.msra.mxu0 %v997
          %1036 = vmatprep.subr.mxu0 0.0
          %1037 = vmatpush1.msra.mxu0 %v998
          %1038 = vmatprep.subr.mxu0 0.0
          %1039 = vmatpush1.msra.mxu0 0.0
          %1040 = vmatprep.subr.mxu0 0.0
          %1041 = vmatpush1.msra.mxu0 0.0
          %1042 = vmatprep.subr.mxu0 0.0
          %1043 = vmatpush1.msra.mxu0 0.0
          %1044 = vmatprep.subr.mxu0 0.0
          %1045 = vmatpush1.msra.mxu0 0.0
          %1046 = vmatprep.subr.mxu0 0.0
          %1047 = vmatpush1.msra.mxu0 0.0
          %1048 = vmatprep.subr.mxu0 0.0
          %1049 = vmatpush1.msra.mxu0 0.0
          %1050 = vmatprep.subr.mxu0 0.0
          %1051 = vmatpush1.msra.mxu0 0.0
          %1052 = vmatprep.subr.mxu0 0.0
          %1053 = vmatpush1.msra.mxu0 0.0
          %1054 = vmatprep.subr.mxu0 0.0
          %1055 = vmatpush1.msra.mxu0 0.0
          %1056 = vmatprep.subr.mxu0 0.0
          %1057 = vmatpush1.msra.mxu0 0.0
          %1058 = vmatprep.subr.mxu0 0.0
          %1059 = vmatpush1.msra.mxu0 0.0
          %1060 = vmatprep.subr.mxu0 0.0
          %1061 = vmatpush1.msra.mxu0 0.0
          %1062 = vmatprep.subr.mxu0 0.0
          %1063 = vmatpush1.msra.mxu0 0.0
          %1064 = vmatprep.subr.mxu0 0.0
          %1065 = vmatpush1.msra.mxu0 0.0
          %1066 = vmatprep.subr.mxu0 0.0
          %1067 = vmatpush1.msra.mxu0 0.0
          %1068 = vmatprep.subr.mxu0 0.0
          %1069 = vmatpush1.msra.mxu0 0.0
          %1070 = vmatprep.mubr.f32.mxu0 0.0
          %1071 = vmatmul.mubr.f32.gmra.mrb[0].mxu0 %v981
          %v1072 = vpop.f32.mrb[0].mxu0
          %v1073 = vadd.f32 %v1004, %v1072
          %v1074 = vpop.f32.mrb[0].mxu0
          %1075 = vmatprep.mubr.f32.mxu0 0.0
          %1076 = vmatmul.mubr.f32.gmra.mrb[0].mxu0 %v982
          %v1077 = vpop.f32.mrb[0].mxu0
          %v1078 = vadd.f32 %v1004, %v1077
          %v1079 = vpop.f32.mrb[0].mxu0
          %1080 = vdwg.mxu0
          %p1081 = scmp.ne.s32.totalorder %s32, 2
          // Predicated region
          $region126: #{tpu_custom_call.1} parent=124 // pred_check
            %p1082 = pneg %p1081
          $region127: #{tpu_custom_call.1} parent=124 // pred_check_branch
            %1084 = sbr.rel (%p1082) target = $region129
          $region128: #{tpu_custom_call.1} parent=124 // pred_region
            %v1085 = vmax.f32 %v1073, 0.0
            %v1086 = vmax.f32 %v1078, 0.0
            %1087 = vst [vmem:[#allocation12] sm:$0xff] %v1085
            %1088 = vst [vmem:[#allocation12 + $0x8] sm:$0xff] %v1086
          $region129: #{tpu_custom_call.1} parent=124 // pred_fallthru
            _
          %p1089 = scmp.eq.s32.totalorder %s32, 2
          // Predicated region
          $region130: #{tpu_custom_call.1} parent=124 // pred_check
            %p1090 = pneg %p1089
          $region131: #{tpu_custom_call.1} parent=124 // pred_check_branch
            %1092 = sbr.rel (%p1090) target = $region133
          $region132: #{tpu_custom_call.1} parent=124 // pred_region
            %1093 = vst [vmem:[#allocation12] sm:$0xff] %v1073
            %1094 = vst [vmem:[#allocation12 + $0x8] sm:$0xff] %v1078
          $region133: #{tpu_custom_call.1} parent=124 // pred_fallthru
            _
        $region125: #{tpu_custom_call.1} parent=92 // pred_fallthru
          _
        // Predicated region
        $region134: #{tpu_custom_call.1} parent=92 // pred_check
          %p1095 = pneg %p279
        $region135: #{tpu_custom_call.1} parent=92 // pred_check_branch
          %1097 = sbr.rel (%p1095) target = $region137
        $region136: #{tpu_custom_call.1} parent=92 // pred_region
          %s1099 = ssub.s32 256, 256
          %1100 = vsyncadd [#allocation5], %s1099
          %s1101 = sshll.u32 [#allocation12], 4
          %s1102 = int_to_ptr.vmem [resolvable:$true] %s1101
          %1107 = dma.vmem_to_hbm [thread:$0]  %s1102, 256, %s9, [#allocation5], 128, 128, 8
        $region137: #{tpu_custom_call.1} parent=92 // pred_fallthru
          _
        // Predicated region
        $region138: #{tpu_custom_call.1} parent=92 // pred_check
          %p1108 = pneg %p279
        $region139: #{tpu_custom_call.1} parent=92 // pred_check_branch
          %1110 = sbr.rel (%p1108) target = $region141
        $region140: #{tpu_custom_call.1} parent=92 // pred_region
          %1111 = dma.done [#allocation5], 256
        $region141: #{tpu_custom_call.1} parent=92 // pred_fallthru
          _
      $region93: #{tpu_custom_call.1} parent=5 // pred_fallthru
        _
      %p1112 = scmp.le.s32.totalorder 2, %s23
      // Predicated region
      $region142: #{tpu_custom_call.1} parent=5 // pred_check
        %p1113 = pneg %p1112
      $region143: #{tpu_custom_call.1} parent=5 // pred_check_branch
        %1115 = sbr.rel (%p1113) target = $region145
      $region144: #{tpu_custom_call.1} parent=5 // pred_region
        %s1116 = ssub.s32 %s23, 2
      $region145: #{tpu_custom_call.1} parent=5 // pred_fallthru
        _
    $region6: #{tpu_custom_call.1} parent=1 // loop_footer
      %s27 = sadd.s32 1, %s23
    $region7: #{tpu_custom_call.1} parent=1 // loop_footer_branch
      %22 = sbr.rel target = $region3
    $region8: #{tpu_custom_call.1} parent=1 // loop_exit
      _
    %1117 = vsyncpa [#allocation4], 1
    %s1118 = scalar_lea.sflag [#allocation4], 1
    %1119 = vsyncpa %s1118, 1
    %1120 = vsyncpa [#allocation10], 1
    %s1121 = scalar_lea.sflag [#allocation10], 1
    %1122 = vsyncpa %s1121, 1
    %1123 = vsyncpa [#allocation5], 1
    %s1124 = scalar_lea.sflag [#allocation5], 1
    %1125 = vsyncpa %s1124, 1
    %1126 = vsyncpa [#allocation6], 1
    %s1127 = scalar_lea.sflag [#allocation6], 1
    %1128 = vsyncpa %s1127, 1

</llo_original>
